<compile_context>
chip_gen: v5e
topology: v5e:2x2
jax: 0.10.0
libtpu: 0.0.40
codegen_flags: <defaults>
</compile_context>

<pallas_src>
import functools

import jax
import jax.numpy as jnp
from jax import lax
from jax.experimental import pallas as pl
from jax.experimental.pallas import tpu as pltpu

# LSNNParameters defaults (norse)
TAU_SYN_INV = 1.0 / 5e-3     # 200.0
TAU_MEM_INV = 1.0 / 1e-2     # 100.0
TAU_ADAPT_INV = 1.0 / 700.0
V_LEAK = 0.0
V_TH = 1.0
V_RESET = 0.0
BETA = 1.8
DT = 0.001

_LANE = 128     # lane width (last dim)
_SUBLANE = 8    # f32 sublane width (second-to-last dim)


def _round_up(x, m):
    return (x + m - 1) // m * m


# ----------------------------------------------------------------------------
# Kernel: one grid step == TB LSNN Euler steps.  State is carried in vregs
# inside the time block and lives across time blocks in the constant-index
# output blocks (VMEM resident).
# ----------------------------------------------------------------------------
def _lsnn_seq_kernel(x_ref, z0_ref, v0_ref, i0_ref, b0_ref, wi_ref, wr_ref,
                     zs_ref, z_ref, v_ref, i_ref, b_ref,
                     *, tb, t_total, mask_tail, unroll):
    t_blk = pl.program_id(1)

    # Seed the resident state once per batch block (first time block).
    @pl.when(t_blk == 0)
    def _():
        z_ref[...] = z0_ref[...]
        v_ref[...] = v0_ref[...]
        i_ref[...] = i0_ref[...]
        b_ref[...] = b0_ref[...]

    def step(s, carry):
        z, v, i, b = carry
        x = x_ref[s]                       # (Btile, in_p), MXU dtype
        # Two accumulating MXU dots (no concat, no full-width cast).
        i_jump = (jnp.dot(x, wi_ref[...], preferred_element_type=jnp.float32)
                  + jnp.dot(z, wr_ref[...], preferred_element_type=jnp.float32))

        # Euler integration of the leaky dynamics (VPU, f32).
        v_dec = v + DT * TAU_MEM_INV * ((V_LEAK - v) + i)
        i_dec = i - DT * TAU_SYN_INV * i
        b_dec = b - DT * TAU_ADAPT_INV * b

        # Jump condition (hard heaviside on the forward pass).
        z_new_f = (v_dec - V_TH + b_dec > 0.0).astype(jnp.float32)

        # Transition equations.
        v_new = (1.0 - z_new_f) * v_dec + z_new_f * V_RESET
        i_new = i_dec + i_jump
        b_new = b_dec + BETA * z_new_f

        z_new = z_new_f.astype(zs_ref.dtype)
        zs_ref[s] = z_new                  # per-step spike output

        if mask_tail:
            # Padded tail steps (t >= t_total) must not advance the state.
            valid = (t_blk * tb + s) < t_total
            z_new = jnp.where(valid, z_new, z)
            v_new = jnp.where(valid, v_new, v)
            i_new = jnp.where(valid, i_new, i)
            b_new = jnp.where(valid, b_new, b)
        return (z_new, v_new, i_new, b_new)

    carry = (z_ref[...], v_ref[...], i_ref[...], b_ref[...])
    z_fin, v_fin, i_fin, b_fin = lax.fori_loop(0, tb, step, carry, unroll=unroll)
    z_ref[...] = z_fin
    v_ref[...] = v_fin
    i_ref[...] = i_fin
    b_ref[...] = b_fin


# ----------------------------------------------------------------------------
# Wrappers
# ----------------------------------------------------------------------------
def prepare_weights(input_weights, recurrent_weights, weight_dtype=jnp.bfloat16):
    """Done ONCE (outside the step path): transpose and zero-pad to lane-dense
    tiles. bf16 by default (MXU-friendly on v6e/v7x, spikes are exact in
    bf16); pass jnp.float32 for exact-f32 behaviour."""
    out_f, in_f = input_weights.shape
    in_p = _round_up(in_f, _LANE)
    out_p = _round_up(out_f, _LANE)
    wi_t = jnp.zeros((in_p, out_p), weight_dtype)
    wi_t = wi_t.at[:in_f, :out_f].set(input_weights.T.astype(weight_dtype))
    wr_t = jnp.zeros((out_p, out_p), weight_dtype)
    wr_t = wr_t.at[:out_f, :out_f].set(recurrent_weights.T.astype(weight_dtype))
    return wi_t, wr_t


@functools.partial(jax.jit,
                   static_argnames=("input_features", "output_features",
                                    "time_block"))
def lsnn_sequence(xs, state, weights, *, input_features, output_features,
                  time_block=8):
    """Run T LSNN steps in a single fused pallas_call.

    xs:      (T, B, input_features) float32 input spikes
    state:   (z, v, i, b), each (B, output_features) float32
    weights: output of prepare_weights -> (W_in^T padded, W_rec^T padded)
    Returns (zs, final_state) with zs of shape (T, B, output_features), f32.
    """
    wi_t, wr_t = weights
    mxu_dtype = wi_t.dtype
    T, B, _ = xs.shape

    in_p = _round_up(input_features, _LANE)
    out_p = _round_up(output_features, _LANE)
    assert wi_t.shape == (in_p, out_p), wi_t.shape
    assert wr_t.shape == (out_p, out_p), wr_t.shape

    # Batch padding / tiling (a parallel batch axis feeds v7x's 2 TensorCores).
    Bp = _round_up(B, _SUBLANE)
    if Bp > 128:
        Bp = _round_up(Bp, 128)
        b_tile = 128
    else:
        b_tile = Bp
    n_b = Bp // b_tile

    # Time blocking.
    tb = max(1, min(time_block, T))
    n_t = -(-T // tb)
    T_pad = n_t * tb
    mask_tail = (T_pad != T)

    if tb * out_p <= 16384:
        unroll = True               # fully unroll small blocks
    elif tb % 4 == 0:
        unroll = 4                  # partial unroll to limit vreg pressure
    elif tb % 2 == 0:
        unroll = 2
    else:
        unroll = 1

    # Pad inputs (lane/sublane dense; MXU-dtype streams for x / zs).
    xs_p = jnp.zeros((T_pad, Bp, in_p), mxu_dtype)
    xs_p = xs_p.at[:T, :B, :input_features].set(xs.astype(mxu_dtype))

    z0, v0, i0, b0 = state

    def pad_state(a, dtype):
        buf = jnp.zeros((Bp, out_p), dtype)
        return buf.at[:B, :output_features].set(a.astype(dtype))

    z0p = pad_state(z0, mxu_dtype)           # z feeds the MXU -> weight dtype
    v0p = pad_state(v0, jnp.float32)
    i0p = pad_state(i0, jnp.float32)
    b0p = pad_state(b0, jnp.float32)

    # Explicit VMEM budget (double-buffered blocks + headroom).
    isz = wi_t.dtype.itemsize
    block_bytes = (
        tb * b_tile * in_p * isz                 # x block
        + tb * b_tile * out_p * isz              # zs block
        + in_p * out_p * isz                     # W_in^T
        + out_p * out_p * isz                    # W_rec^T
        + b_tile * out_p * (2 * isz + 6 * 4)     # z0/z (mxu) + v0,i0,b0,v,i,b (f32)
    )
    vmem_limit = int(min(max(2 * block_bytes + (4 << 20), 16 << 20), 64 << 20))

    kernel = functools.partial(_lsnn_seq_kernel, tb=tb, t_total=T,
                               mask_tail=mask_tail, unroll=unroll)

    seq_spec_in = pl.BlockSpec((tb, b_tile, in_p), lambda bb, tt: (tt, bb, 0))
    seq_spec_out = pl.BlockSpec((tb, b_tile, out_p), lambda bb, tt: (tt, bb, 0))
    state_spec = pl.BlockSpec((b_tile, out_p), lambda bb, tt: (bb, 0))
    wi_spec = pl.BlockSpec((in_p, out_p), lambda bb, tt: (0, 0))
    wr_spec = pl.BlockSpec((out_p, out_p), lambda bb, tt: (0, 0))

    zs_p, z_f, v_f, i_f, b_f = pl.pallas_call(
        kernel,
        out_shape=(
            jax.ShapeDtypeStruct((T_pad, Bp, out_p), mxu_dtype),   # spike seq
            jax.ShapeDtypeStruct((Bp, out_p), mxu_dtype),          # z state
            jax.ShapeDtypeStruct((Bp, out_p), jnp.float32),        # v state
            jax.ShapeDtypeStruct((Bp, out_p), jnp.float32),        # i state
            jax.ShapeDtypeStruct((Bp, out_p), jnp.float32),        # b state
        ),
        grid=(n_b, n_t),
        in_specs=[seq_spec_in,                                     # x, streamed
                  state_spec, state_spec, state_spec, state_spec,  # init state
                  wi_spec, wr_spec],                               # weights
        out_specs=(seq_spec_out,
                   state_spec, state_spec, state_spec, state_spec),
        compiler_params=pltpu.CompilerParams(
            dimension_semantics=("parallel", "arbitrary"),
            vmem_limit_bytes=vmem_limit),
    )(xs_p, z0p, v0p, i0p, b0p, wi_t, wr_t)

    zs = zs_p[:T, :B, :output_features].astype(jnp.float32)
    new_state = (
        z_f[:B, :output_features].astype(jnp.float32),
        v_f[:B, :output_features],
        i_f[:B, :output_features],
        b_f[:B, :output_features],
    )
    return zs, new_state


def lsnn_cell_step(x, state, weights, *, input_features, output_features):
    """Single-step forward, matching LSNNCell.forward semantics."""
    zs, new_state = lsnn_sequence(x[None], state, weights,
                                  input_features=input_features,
                                  output_features=output_features,
                                  time_block=1)
    return zs[0], new_state


# ----------------------------------------------------------------------------
# Pure-JAX reference (faithful to the PyTorch module)
# ----------------------------------------------------------------------------
def _reference_step(x, state, input_weights, recurrent_weights):
    z, v, i, b = state
    v_decayed = v + DT * TAU_MEM_INV * ((V_LEAK - v) + i)
    i_decayed = i - DT * TAU_SYN_INV * i
    b_decayed = b - DT * TAU_ADAPT_INV * b
    z_new = (v_decayed - V_TH + b_decayed > 0.0).astype(jnp.float32)
    v_new = (1.0 - z_new) * v_decayed + z_new * V_RESET
    i_new = i_decayed + x @ input_weights.T + z @ recurrent_weights.T
    b_new = b_decayed + BETA * z_new
    return z_new, (z_new, v_new, i_new, b_new)


def _reference_sequence(xs, state, input_weights, recurrent_weights):
    def body(st, x):
        z, st2 = _reference_step(x, st, input_weights, recurrent_weights)
        return st2, z
    st_final, zs = jax.lax.scan(body, state, xs)
    return zs, st_final


if __name__ == "__main__":
    batch = 2
    input_features = 16
    output_features = 32
    seq_len = 8

    key = jax.random.PRNGKey(0)
    k_wi, k_wr, k_x, k_v, k_i, k_b, k_z = jax.random.split(key, 7)

    # Deterministic parameter init matching torch.nn.Parameter shapes.
    input_weights = (
        jax.random.normal(k_wi, (output_features, input_features), jnp.float32)
        / jnp.sqrt(jnp.float32(input_features))
    )
    recurrent_weights = jax.random.normal(
        k_wr, (output_features, output_features), jnp.float32)

    # Input spike train and a non-trivial initial state (some neurons spike).
    xs = (jax.random.uniform(k_x, (seq_len, batch, input_features)) < 0.3
          ).astype(jnp.float32)
    z0 = (jax.random.uniform(k_z, (batch, output_features)) < 0.2
          ).astype(jnp.float32)
    v0 = jax.random.uniform(k_v, (batch, output_features), jnp.float32, 0.0, 1.5)
    i0 = jax.random.uniform(k_i, (batch, output_features), jnp.float32, -1.0, 1.0)
    b0 = jax.random.uniform(k_b, (batch, output_features), jnp.float32, 0.0, 0.5)
    state = (z0, v0, i0, b0)

    # Exact-precision path (f32 weights) for the correctness check.
    w_f32 = prepare_weights(input_weights, recurrent_weights,
                            weight_dtype=jnp.float32)

    # Fused multi-step kernel, two time blocks of 4 steps.
    zs, final_state = lsnn_sequence(xs, state, w_f32,
                                    input_features=input_features,
                                    output_features=output_features,
                                    time_block=4)
    jax.block_until_ready(final_state)

    # Tail-masked path (T % time_block != 0) exercises remainder handling.
    zs_m, final_m = lsnn_sequence(xs, state, w_f32,
                                  input_features=input_features,
                                  output_features=output_features,
                                  time_block=3)
    jax.block_until_ready(final_m)

    # Single-step forward (module semantics).
    z1, state1 = lsnn_cell_step(xs[0], state, w_f32,
                                input_features=input_features,
                                output_features=output_features)
    jax.block_until_ready(state1)

    # bf16-weight fast path (the production default): run once for coverage.
    w_bf16 = prepare_weights(input_weights, recurrent_weights)
    zs_bf, final_bf = lsnn_sequence(xs, state, w_bf16,
                                    input_features=input_features,
                                    output_features=output_features)
    jax.block_until_ready(final_bf)

    # Correctness vs. pure-JAX reference (f32 path).
    zs_ref, final_ref = _reference_sequence(xs, state, input_weights,
                                            recurrent_weights)
    z1_ref, state1_ref = _reference_step(xs[0], state, input_weights,
                                         recurrent_weights)

    def check(a, b):
        assert a.shape == b.shape, (a.shape, b.shape)
        assert jnp.allclose(a, b, atol=1e-4, rtol=1e-4), "mismatch vs reference"

    check(zs, zs_ref)
    check(zs_m, zs_ref)
    for got, ref in zip(final_state, final_ref):
        check(got, ref)
    for got, ref in zip(final_m, final_ref):
        check(got, ref)
    check(z1, z1_ref)
    for got, ref in zip(state1, state1_ref):
        check(got, ref)

    # bf16 path: spikes must still be binary and shapes must match.
    assert zs_bf.shape == zs_ref.shape
    assert bool(jnp.all((zs_bf == 0.0) | (zs_bf == 1.0)))

    print("KERNEL_OK")
</pallas_src>

<mosaic_0001>
module attributes {stable_mosaic.version = 11 : i64} {
  func.func @_lsnn_seq_kernel(%arg0: i32, %arg1: i32, %arg2: memref<4x8x128xf32, #tpu.memory_space<vmem>>, %arg3: memref<8x128xf32, #tpu.memory_space<vmem>>, %arg4: memref<8x128xf32, #tpu.memory_space<vmem>>, %arg5: memref<8x128xf32, #tpu.memory_space<vmem>>, %arg6: memref<8x128xf32, #tpu.memory_space<vmem>>, %arg7: memref<128x128xf32, #tpu.memory_space<vmem>>, %arg8: memref<128x128xf32, #tpu.memory_space<vmem>>, %arg9: memref<4x8x128xf32, #tpu.memory_space<vmem>>, %arg10: memref<8x128xf32, #tpu.memory_space<vmem>>, %arg11: memref<8x128xf32, #tpu.memory_space<vmem>>, %arg12: memref<8x128xf32, #tpu.memory_space<vmem>>, %arg13: memref<8x128xf32, #tpu.memory_space<vmem>>) attributes {dimension_semantics = [#tpu.dimension_semantics<parallel>, #tpu.dimension_semantics<arbitrary>], iteration_bounds = array<i64: 1, 2>, scalar_prefetch = 0 : i64, scratch_operands = 0 : i64, tpu.core_type = #tpu.core_type<tc>, window_params = [{transform_indices = @transform_0, window_bounds = array<i64: 4, 8, 128>}, {transform_indices = @transform_1, window_bounds = array<i64: 8, 128>}, {transform_indices = @transform_2, window_bounds = array<i64: 8, 128>}, {transform_indices = @transform_3, window_bounds = array<i64: 8, 128>}, {transform_indices = @transform_4, window_bounds = array<i64: 8, 128>}, {pipeline_mode = #tpu.pipeline_mode<synchronous>, transform_indices = @transform_5, window_bounds = array<i64: 128, 128>}, {pipeline_mode = #tpu.pipeline_mode<synchronous>, transform_indices = @transform_6, window_bounds = array<i64: 128, 128>}, {transform_indices = @transform_7, window_bounds = array<i64: 4, 8, 128>}, {transform_indices = @transform_8, window_bounds = array<i64: 8, 128>}, {transform_indices = @transform_9, window_bounds = array<i64: 8, 128>}, {transform_indices = @transform_10, window_bounds = array<i64: 8, 128>}, {transform_indices = @transform_11, window_bounds = array<i64: 8, 128>}]} {
    %c0_i32 = arith.constant 0 : i32
    %0 = arith.cmpi eq, %arg1, %c0_i32 : i32
    %1 = arith.extui %0 : i1 to i32
    %c0_i32_0 = arith.constant 0 : i32
    %2 = arith.cmpi ne, %1, %c0_i32_0 : i32
    scf.if %2 {
      %c0_92 = arith.constant 0 : index
      %c0_93 = arith.constant 0 : index
      %175 = vector.load %arg3[%c0_92, %c0_93] : memref<8x128xf32, #tpu.memory_space<vmem>>, vector<8x128xf32>
      %c0_94 = arith.constant 0 : index
      %c0_95 = arith.constant 0 : index
      %176 = vector.load %arg10[%c0_94, %c0_95] : memref<8x128xf32, #tpu.memory_space<vmem>>, vector<8x128xf32>
      tpu.vector_store %arg10[%c0_94, %c0_95], %175 {strides = array<i32>} : memref<8x128xf32, #tpu.memory_space<vmem>>, vector<8x128xf32>,
      %c0_96 = arith.constant 0 : index
      %c0_97 = arith.constant 0 : index
      %177 = vector.load %arg4[%c0_96, %c0_97] : memref<8x128xf32, #tpu.memory_space<vmem>>, vector<8x128xf32>
      %c0_98 = arith.constant 0 : index
      %c0_99 = arith.constant 0 : index
      %178 = vector.load %arg11[%c0_98, %c0_99] : memref<8x128xf32, #tpu.memory_space<vmem>>, vector<8x128xf32>
      tpu.vector_store %arg11[%c0_98, %c0_99], %177 {strides = array<i32>} : memref<8x128xf32, #tpu.memory_space<vmem>>, vector<8x128xf32>,
      %c0_100 = arith.constant 0 : index
      %c0_101 = arith.constant 0 : index
      %179 = vector.load %arg5[%c0_100, %c0_101] : memref<8x128xf32, #tpu.memory_space<vmem>>, vector<8x128xf32>
      %c0_102 = arith.constant 0 : index
      %c0_103 = arith.constant 0 : index
      %180 = vector.load %arg12[%c0_102, %c0_103] : memref<8x128xf32, #tpu.memory_space<vmem>>, vector<8x128xf32>
      tpu.vector_store %arg12[%c0_102, %c0_103], %179 {strides = array<i32>} : memref<8x128xf32, #tpu.memory_space<vmem>>, vector<8x128xf32>,
      %c0_104 = arith.constant 0 : index
      %c0_105 = arith.constant 0 : index
      %181 = vector.load %arg6[%c0_104, %c0_105] : memref<8x128xf32, #tpu.memory_space<vmem>>, vector<8x128xf32>
      %c0_106 = arith.constant 0 : index
      %c0_107 = arith.constant 0 : index
      %182 = vector.load %arg13[%c0_106, %c0_107] : memref<8x128xf32, #tpu.memory_space<vmem>>, vector<8x128xf32>
      tpu.vector_store %arg13[%c0_106, %c0_107], %181 {strides = array<i32>} : memref<8x128xf32, #tpu.memory_space<vmem>>, vector<8x128xf32>,
    } else {
    }
    %c0 = arith.constant 0 : index
    %c0_1 = arith.constant 0 : index
    %3 = vector.load %arg10[%c0, %c0_1] : memref<8x128xf32, #tpu.memory_space<vmem>>, vector<8x128xf32>
    %c0_2 = arith.constant 0 : index
    %c0_3 = arith.constant 0 : index
    %4 = vector.load %arg11[%c0_2, %c0_3] : memref<8x128xf32, #tpu.memory_space<vmem>>, vector<8x128xf32>
    %c0_4 = arith.constant 0 : index
    %c0_5 = arith.constant 0 : index
    %5 = vector.load %arg12[%c0_4, %c0_5] : memref<8x128xf32, #tpu.memory_space<vmem>>, vector<8x128xf32>
    %c0_6 = arith.constant 0 : index
    %c0_7 = arith.constant 0 : index
    %6 = vector.load %arg13[%c0_6, %c0_7] : memref<8x128xf32, #tpu.memory_space<vmem>>, vector<8x128xf32>
    %c0_i32_8 = arith.constant 0 : i32
    %7 = arith.index_cast %c0_i32_8 : i32 to index
    %c0_9 = arith.constant 0 : index
    %c0_10 = arith.constant 0 : index
    %8 = vector.load %arg2[%7, %c0_9, %c0_10] : memref<4x8x128xf32, #tpu.memory_space<vmem>>, vector<1x8x128xf32>
    %9 = vector.shape_cast %8 : vector<1x8x128xf32> to vector<8x128xf32>
    %c0_11 = arith.constant 0 : index
    %c0_12 = arith.constant 0 : index
    %10 = vector.load %arg7[%c0_11, %c0_12] : memref<128x128xf32, #tpu.memory_space<vmem>>, vector<128x128xf32>
    %cst = arith.constant dense<0.000000e+00> : vector<8x128xf32>
    %11 = tpu.matmul %9, %10, %cst {dimension_numbers = #tpu.dot_dimension_numbers<[1], [0], [0], [1], [0, 0, 1, 1], [], []>} : vector<8x128xf32>, vector<128x128xf32>, vector<8x128xf32> -> vector<8x128xf32>
    %c0_13 = arith.constant 0 : index
    %c0_14 = arith.constant 0 : index
    %12 = vector.load %arg8[%c0_13, %c0_14] : memref<128x128xf32, #tpu.memory_space<vmem>>, vector<128x128xf32>
    %cst_15 = arith.constant dense<0.000000e+00> : vector<8x128xf32>
    %13 = tpu.matmul %3, %12, %cst_15 {dimension_numbers = #tpu.dot_dimension_numbers<[1], [0], [0], [1], [0, 0, 1, 1], [], []>} : vector<8x128xf32>, vector<128x128xf32>, vector<8x128xf32> -> vector<8x128xf32>
    %14 = arith.addf %11, %13 : vector<8x128xf32>
    %cst_16 = arith.constant 0.000000e+00 : f32
    %15 = vector.broadcast %cst_16 : f32 to vector<8x128xf32>
    %16 = arith.subf %15, %4 : vector<8x128xf32>
    %17 = arith.addf %16, %5 : vector<8x128xf32>
    %cst_17 = arith.constant 1.000000e-01 : f32
    %18 = vector.broadcast %cst_17 : f32 to vector<8x128xf32>
    %19 = arith.mulf %18, %17 : vector<8x128xf32>
    %20 = arith.addf %4, %19 : vector<8x128xf32>
    %cst_18 = arith.constant 2.000000e-01 : f32
    %21 = vector.broadcast %cst_18 : f32 to vector<8x128xf32>
    %22 = arith.mulf %21, %5 : vector<8x128xf32>
    %23 = arith.subf %5, %22 : vector<8x128xf32>
    %cst_19 = arith.constant 1.42857141E-6 : f32
    %24 = vector.broadcast %cst_19 : f32 to vector<8x128xf32>
    %25 = arith.mulf %24, %6 : vector<8x128xf32>
    %26 = arith.subf %6, %25 : vector<8x128xf32>
    %cst_20 = arith.constant 1.000000e+00 : f32
    %27 = vector.broadcast %cst_20 : f32 to vector<8x128xf32>
    %28 = arith.subf %20, %27 : vector<8x128xf32>
    %29 = arith.addf %28, %26 : vector<8x128xf32>
    %cst_21 = arith.constant 0.000000e+00 : f32
    %30 = vector.broadcast %cst_21 : f32 to vector<8x128xf32>
    %31 = arith.cmpf ogt, %29, %30 : vector<8x128xf32>
    %32 = arith.extui %31 : vector<8x128xi1> to vector<8x128xi32>
    %33 = arith.sitofp %32 : vector<8x128xi32> to vector<8x128xf32>
    %cst_22 = arith.constant 1.000000e+00 : f32
    %34 = vector.broadcast %cst_22 : f32 to vector<8x128xf32>
    %35 = arith.subf %34, %33 : vector<8x128xf32>
    %36 = arith.mulf %35, %20 : vector<8x128xf32>
    %cst_23 = arith.constant 0.000000e+00 : f32
    %37 = vector.broadcast %cst_23 : f32 to vector<8x128xf32>
    %38 = arith.mulf %33, %37 : vector<8x128xf32>
    %39 = arith.addf %36, %38 : vector<8x128xf32>
    %40 = arith.addf %23, %14 : vector<8x128xf32>
    %cst_24 = arith.constant 1.800000e+00 : f32
    %41 = vector.broadcast %cst_24 : f32 to vector<8x128xf32>
    %42 = arith.mulf %41, %33 : vector<8x128xf32>
    %43 = arith.addf %26, %42 : vector<8x128xf32>
    %44 = arith.index_cast %c0_i32_8 : i32 to index
    %c0_25 = arith.constant 0 : index
    %c0_26 = arith.constant 0 : index
    %45 = vector.load %arg9[%44, %c0_25, %c0_26] : memref<4x8x128xf32, #tpu.memory_space<vmem>>, vector<1x8x128xf32>
    %46 = vector.shape_cast %45 : vector<1x8x128xf32> to vector<8x128xf32>
    %47 = vector.shape_cast %33 : vector<8x128xf32> to vector<1x8x128xf32>
    tpu.vector_store %arg9[%44, %c0_25, %c0_26], %47 {strides = array<i32>} : memref<4x8x128xf32, #tpu.memory_space<vmem>>, vector<1x8x128xf32>,
    %c1_i32 = arith.constant 1 : i32
    %48 = arith.index_cast %c1_i32 : i32 to index
    %c0_27 = arith.constant 0 : index
    %c0_28 = arith.constant 0 : index
    %49 = vector.load %arg2[%48, %c0_27, %c0_28] : memref<4x8x128xf32, #tpu.memory_space<vmem>>, vector<1x8x128xf32>
    %50 = vector.shape_cast %49 : vector<1x8x128xf32> to vector<8x128xf32>
    %c0_29 = arith.constant 0 : index
    %c0_30 = arith.constant 0 : index
    %51 = vector.load %arg7[%c0_29, %c0_30] : memref<128x128xf32, #tpu.memory_space<vmem>>, vector<128x128xf32>
    %cst_31 = arith.constant dense<0.000000e+00> : vector<8x128xf32>
    %52 = tpu.matmul %50, %51, %cst_31 {dimension_numbers = #tpu.dot_dimension_numbers<[1], [0], [0], [1], [0, 0, 1, 1], [], []>} : vector<8x128xf32>, vector<128x128xf32>, vector<8x128xf32> -> vector<8x128xf32>
    %c0_32 = arith.constant 0 : index
    %c0_33 = arith.constant 0 : index
    %53 = vector.load %arg8[%c0_32, %c0_33] : memref<128x128xf32, #tpu.memory_space<vmem>>, vector<128x128xf32>
    %cst_34 = arith.constant dense<0.000000e+00> : vector<8x128xf32>
    %54 = tpu.matmul %33, %53, %cst_34 {dimension_numbers = #tpu.dot_dimension_numbers<[1], [0], [0], [1], [0, 0, 1, 1], [], []>} : vector<8x128xf32>, vector<128x128xf32>, vector<8x128xf32> -> vector<8x128xf32>
    %55 = arith.addf %52, %54 : vector<8x128xf32>
    %cst_35 = arith.constant 0.000000e+00 : f32
    %56 = vector.broadcast %cst_35 : f32 to vector<8x128xf32>
    %57 = arith.subf %56, %39 : vector<8x128xf32>
    %58 = arith.addf %57, %40 : vector<8x128xf32>
    %cst_36 = arith.constant 1.000000e-01 : f32
    %59 = vector.broadcast %cst_36 : f32 to vector<8x128xf32>
    %60 = arith.mulf %59, %58 : vector<8x128xf32>
    %61 = arith.addf %39, %60 : vector<8x128xf32>
    %cst_37 = arith.constant 2.000000e-01 : f32
    %62 = vector.broadcast %cst_37 : f32 to vector<8x128xf32>
    %63 = arith.mulf %62, %40 : vector<8x128xf32>
    %64 = arith.subf %40, %63 : vector<8x128xf32>
    %cst_38 = arith.constant 1.42857141E-6 : f32
    %65 = vector.broadcast %cst_38 : f32 to vector<8x128xf32>
    %66 = arith.mulf %65, %43 : vector<8x128xf32>
    %67 = arith.subf %43, %66 : vector<8x128xf32>
    %cst_39 = arith.constant 1.000000e+00 : f32
    %68 = vector.broadcast %cst_39 : f32 to vector<8x128xf32>
    %69 = arith.subf %61, %68 : vector<8x128xf32>
    %70 = arith.addf %69, %67 : vector<8x128xf32>
    %cst_40 = arith.constant 0.000000e+00 : f32
    %71 = vector.broadcast %cst_40 : f32 to vector<8x128xf32>
    %72 = arith.cmpf ogt, %70, %71 : vector<8x128xf32>
    %73 = arith.extui %72 : vector<8x128xi1> to vector<8x128xi32>
    %74 = arith.sitofp %73 : vector<8x128xi32> to vector<8x128xf32>
    %cst_41 = arith.constant 1.000000e+00 : f32
    %75 = vector.broadcast %cst_41 : f32 to vector<8x128xf32>
    %76 = arith.subf %75, %74 : vector<8x128xf32>
    %77 = arith.mulf %76, %61 : vector<8x128xf32>
    %cst_42 = arith.constant 0.000000e+00 : f32
    %78 = vector.broadcast %cst_42 : f32 to vector<8x128xf32>
    %79 = arith.mulf %74, %78 : vector<8x128xf32>
    %80 = arith.addf %77, %79 : vector<8x128xf32>
    %81 = arith.addf %64, %55 : vector<8x128xf32>
    %cst_43 = arith.constant 1.800000e+00 : f32
    %82 = vector.broadcast %cst_43 : f32 to vector<8x128xf32>
    %83 = arith.mulf %82, %74 : vector<8x128xf32>
    %84 = arith.addf %67, %83 : vector<8x128xf32>
    %85 = arith.index_cast %c1_i32 : i32 to index
    %c0_44 = arith.constant 0 : index
    %c0_45 = arith.constant 0 : index
    %86 = vector.load %arg9[%85, %c0_44, %c0_45] : memref<4x8x128xf32, #tpu.memory_space<vmem>>, vector<1x8x128xf32>
    %87 = vector.shape_cast %86 : vector<1x8x128xf32> to vector<8x128xf32>
    %88 = vector.shape_cast %74 : vector<8x128xf32> to vector<1x8x128xf32>
    tpu.vector_store %arg9[%85, %c0_44, %c0_45], %88 {strides = array<i32>} : memref<4x8x128xf32, #tpu.memory_space<vmem>>, vector<1x8x128xf32>,
    %c2_i32 = arith.constant 2 : i32
    %89 = arith.index_cast %c2_i32 : i32 to index
    %c0_46 = arith.constant 0 : index
    %c0_47 = arith.constant 0 : index
    %90 = vector.load %arg2[%89, %c0_46, %c0_47] : memref<4x8x128xf32, #tpu.memory_space<vmem>>, vector<1x8x128xf32>
    %91 = vector.shape_cast %90 : vector<1x8x128xf32> to vector<8x128xf32>
    %c0_48 = arith.constant 0 : index
    %c0_49 = arith.constant 0 : index
    %92 = vector.load %arg7[%c0_48, %c0_49] : memref<128x128xf32, #tpu.memory_space<vmem>>, vector<128x128xf32>
    %cst_50 = arith.constant dense<0.000000e+00> : vector<8x128xf32>
    %93 = tpu.matmul %91, %92, %cst_50 {dimension_numbers = #tpu.dot_dimension_numbers<[1], [0], [0], [1], [0, 0, 1, 1], [], []>} : vector<8x128xf32>, vector<128x128xf32>, vector<8x128xf32> -> vector<8x128xf32>
    %c0_51 = arith.constant 0 : index
    %c0_52 = arith.constant 0 : index
    %94 = vector.load %arg8[%c0_51, %c0_52] : memref<128x128xf32, #tpu.memory_space<vmem>>, vector<128x128xf32>
    %cst_53 = arith.constant dense<0.000000e+00> : vector<8x128xf32>
    %95 = tpu.matmul %74, %94, %cst_53 {dimension_numbers = #tpu.dot_dimension_numbers<[1], [0], [0], [1], [0, 0, 1, 1], [], []>} : vector<8x128xf32>, vector<128x128xf32>, vector<8x128xf32> -> vector<8x128xf32>
    %96 = arith.addf %93, %95 : vector<8x128xf32>
    %cst_54 = arith.constant 0.000000e+00 : f32
    %97 = vector.broadcast %cst_54 : f32 to vector<8x128xf32>
    %98 = arith.subf %97, %80 : vector<8x128xf32>
    %99 = arith.addf %98, %81 : vector<8x128xf32>
    %cst_55 = arith.constant 1.000000e-01 : f32
    %100 = vector.broadcast %cst_55 : f32 to vector<8x128xf32>
    %101 = arith.mulf %100, %99 : vector<8x128xf32>
    %102 = arith.addf %80, %101 : vector<8x128xf32>
    %cst_56 = arith.constant 2.000000e-01 : f32
    %103 = vector.broadcast %cst_56 : f32 to vector<8x128xf32>
    %104 = arith.mulf %103, %81 : vector<8x128xf32>
    %105 = arith.subf %81, %104 : vector<8x128xf32>
    %cst_57 = arith.constant 1.42857141E-6 : f32
    %106 = vector.broadcast %cst_57 : f32 to vector<8x128xf32>
    %107 = arith.mulf %106, %84 : vector<8x128xf32>
    %108 = arith.subf %84, %107 : vector<8x128xf32>
    %cst_58 = arith.constant 1.000000e+00 : f32
    %109 = vector.broadcast %cst_58 : f32 to vector<8x128xf32>
    %110 = arith.subf %102, %109 : vector<8x128xf32>
    %111 = arith.addf %110, %108 : vector<8x128xf32>
    %cst_59 = arith.constant 0.000000e+00 : f32
    %112 = vector.broadcast %cst_59 : f32 to vector<8x128xf32>
    %113 = arith.cmpf ogt, %111, %112 : vector<8x128xf32>
    %114 = arith.extui %113 : vector<8x128xi1> to vector<8x128xi32>
    %115 = arith.sitofp %114 : vector<8x128xi32> to vector<8x128xf32>
    %cst_60 = arith.constant 1.000000e+00 : f32
    %116 = vector.broadcast %cst_60 : f32 to vector<8x128xf32>
    %117 = arith.subf %116, %115 : vector<8x128xf32>
    %118 = arith.mulf %117, %102 : vector<8x128xf32>
    %cst_61 = arith.constant 0.000000e+00 : f32
    %119 = vector.broadcast %cst_61 : f32 to vector<8x128xf32>
    %120 = arith.mulf %115, %119 : vector<8x128xf32>
    %121 = arith.addf %118, %120 : vector<8x128xf32>
    %122 = arith.addf %105, %96 : vector<8x128xf32>
    %cst_62 = arith.constant 1.800000e+00 : f32
    %123 = vector.broadcast %cst_62 : f32 to vector<8x128xf32>
    %124 = arith.mulf %123, %115 : vector<8x128xf32>
    %125 = arith.addf %108, %124 : vector<8x128xf32>
    %126 = arith.index_cast %c2_i32 : i32 to index
    %c0_63 = arith.constant 0 : index
    %c0_64 = arith.constant 0 : index
    %127 = vector.load %arg9[%126, %c0_63, %c0_64] : memref<4x8x128xf32, #tpu.memory_space<vmem>>, vector<1x8x128xf32>
    %128 = vector.shape_cast %127 : vector<1x8x128xf32> to vector<8x128xf32>
    %129 = vector.shape_cast %115 : vector<8x128xf32> to vector<1x8x128xf32>
    tpu.vector_store %arg9[%126, %c0_63, %c0_64], %129 {strides = array<i32>} : memref<4x8x128xf32, #tpu.memory_space<vmem>>, vector<1x8x128xf32>,
    %c3_i32 = arith.constant 3 : i32
    %130 = arith.index_cast %c3_i32 : i32 to index
    %c0_65 = arith.constant 0 : index
    %c0_66 = arith.constant 0 : index
    %131 = vector.load %arg2[%130, %c0_65, %c0_66] : memref<4x8x128xf32, #tpu.memory_space<vmem>>, vector<1x8x128xf32>
    %132 = vector.shape_cast %131 : vector<1x8x128xf32> to vector<8x128xf32>
    %c0_67 = arith.constant 0 : index
    %c0_68 = arith.constant 0 : index
    %133 = vector.load %arg7[%c0_67, %c0_68] : memref<128x128xf32, #tpu.memory_space<vmem>>, vector<128x128xf32>
    %cst_69 = arith.constant dense<0.000000e+00> : vector<8x128xf32>
    %134 = tpu.matmul %132, %133, %cst_69 {dimension_numbers = #tpu.dot_dimension_numbers<[1], [0], [0], [1], [0, 0, 1, 1], [], []>} : vector<8x128xf32>, vector<128x128xf32>, vector<8x128xf32> -> vector<8x128xf32>
    %c0_70 = arith.constant 0 : index
    %c0_71 = arith.constant 0 : index
    %135 = vector.load %arg8[%c0_70, %c0_71] : memref<128x128xf32, #tpu.memory_space<vmem>>, vector<128x128xf32>
    %cst_72 = arith.constant dense<0.000000e+00> : vector<8x128xf32>
    %136 = tpu.matmul %115, %135, %cst_72 {dimension_numbers = #tpu.dot_dimension_numbers<[1], [0], [0], [1], [0, 0, 1, 1], [], []>} : vector<8x128xf32>, vector<128x128xf32>, vector<8x128xf32> -> vector<8x128xf32>
    %137 = arith.addf %134, %136 : vector<8x128xf32>
    %cst_73 = arith.constant 0.000000e+00 : f32
    %138 = vector.broadcast %cst_73 : f32 to vector<8x128xf32>
    %139 = arith.subf %138, %121 : vector<8x128xf32>
    %140 = arith.addf %139, %122 : vector<8x128xf32>
    %cst_74 = arith.constant 1.000000e-01 : f32
    %141 = vector.broadcast %cst_74 : f32 to vector<8x128xf32>
    %142 = arith.mulf %141, %140 : vector<8x128xf32>
    %143 = arith.addf %121, %142 : vector<8x128xf32>
    %cst_75 = arith.constant 2.000000e-01 : f32
    %144 = vector.broadcast %cst_75 : f32 to vector<8x128xf32>
    %145 = arith.mulf %144, %122 : vector<8x128xf32>
    %146 = arith.subf %122, %145 : vector<8x128xf32>
    %cst_76 = arith.constant 1.42857141E-6 : f32
    %147 = vector.broadcast %cst_76 : f32 to vector<8x128xf32>
    %148 = arith.mulf %147, %125 : vector<8x128xf32>
    %149 = arith.subf %125, %148 : vector<8x128xf32>
    %cst_77 = arith.constant 1.000000e+00 : f32
    %150 = vector.broadcast %cst_77 : f32 to vector<8x128xf32>
    %151 = arith.subf %143, %150 : vector<8x128xf32>
    %152 = arith.addf %151, %149 : vector<8x128xf32>
    %cst_78 = arith.constant 0.000000e+00 : f32
    %153 = vector.broadcast %cst_78 : f32 to vector<8x128xf32>
    %154 = arith.cmpf ogt, %152, %153 : vector<8x128xf32>
    %155 = arith.extui %154 : vector<8x128xi1> to vector<8x128xi32>
    %156 = arith.sitofp %155 : vector<8x128xi32> to vector<8x128xf32>
    %cst_79 = arith.constant 1.000000e+00 : f32
    %157 = vector.broadcast %cst_79 : f32 to vector<8x128xf32>
    %158 = arith.subf %157, %156 : vector<8x128xf32>
    %159 = arith.mulf %158, %143 : vector<8x128xf32>
    %cst_80 = arith.constant 0.000000e+00 : f32
    %160 = vector.broadcast %cst_80 : f32 to vector<8x128xf32>
    %161 = arith.mulf %156, %160 : vector<8x128xf32>
    %162 = arith.addf %159, %161 : vector<8x128xf32>
    %163 = arith.addf %146, %137 : vector<8x128xf32>
    %cst_81 = arith.constant 1.800000e+00 : f32
    %164 = vector.broadcast %cst_81 : f32 to vector<8x128xf32>
    %165 = arith.mulf %164, %156 : vector<8x128xf32>
    %166 = arith.addf %149, %165 : vector<8x128xf32>
    %167 = arith.index_cast %c3_i32 : i32 to index
    %c0_82 = arith.constant 0 : index
    %c0_83 = arith.constant 0 : index
    %168 = vector.load %arg9[%167, %c0_82, %c0_83] : memref<4x8x128xf32, #tpu.memory_space<vmem>>, vector<1x8x128xf32>
    %169 = vector.shape_cast %168 : vector<1x8x128xf32> to vector<8x128xf32>
    %170 = vector.shape_cast %156 : vector<8x128xf32> to vector<1x8x128xf32>
    tpu.vector_store %arg9[%167, %c0_82, %c0_83], %170 {strides = array<i32>} : memref<4x8x128xf32, #tpu.memory_space<vmem>>, vector<1x8x128xf32>,
    %c4_i32 = arith.constant 4 : i32
    %c0_84 = arith.constant 0 : index
    %c0_85 = arith.constant 0 : index
    %171 = vector.load %arg10[%c0_84, %c0_85] : memref<8x128xf32, #tpu.memory_space<vmem>>, vector<8x128xf32>
    tpu.vector_store %arg10[%c0_84, %c0_85], %156 {strides = array<i32>} : memref<8x128xf32, #tpu.memory_space<vmem>>, vector<8x128xf32>,
    %c0_86 = arith.constant 0 : index
    %c0_87 = arith.constant 0 : index
    %172 = vector.load %arg11[%c0_86, %c0_87] : memref<8x128xf32, #tpu.memory_space<vmem>>, vector<8x128xf32>
    tpu.vector_store %arg11[%c0_86, %c0_87], %162 {strides = array<i32>} : memref<8x128xf32, #tpu.memory_space<vmem>>, vector<8x128xf32>,
    %c0_88 = arith.constant 0 : index
    %c0_89 = arith.constant 0 : index
    %173 = vector.load %arg12[%c0_88, %c0_89] : memref<8x128xf32, #tpu.memory_space<vmem>>, vector<8x128xf32>
    tpu.vector_store %arg12[%c0_88, %c0_89], %163 {strides = array<i32>} : memref<8x128xf32, #tpu.memory_space<vmem>>, vector<8x128xf32>,
    %c0_90 = arith.constant 0 : index
    %c0_91 = arith.constant 0 : index
    %174 = vector.load %arg13[%c0_90, %c0_91] : memref<8x128xf32, #tpu.memory_space<vmem>>, vector<8x128xf32>
    tpu.vector_store %arg13[%c0_90, %c0_91], %166 {strides = array<i32>} : memref<8x128xf32, #tpu.memory_space<vmem>>, vector<8x128xf32>,
    return
  }
  func.func @transform_0(%arg0: i32, %arg1: i32) -> (i32, i32, i32) {
    %c0_i32 = arith.constant 0 : i32
    %c0_i32_0 = arith.constant 0 : i32
    return %arg1, %arg0, %c0_i32 : i32, i32, i32
  }
  func.func @transform_1(%arg0: i32, %arg1: i32) -> (i32, i32) {
    %c0_i32 = arith.constant 0 : i32
    %c0_i32_0 = arith.constant 0 : i32
    return %arg0, %c0_i32 : i32, i32
  }
  func.func @transform_2(%arg0: i32, %arg1: i32) -> (i32, i32) {
    %c0_i32 = arith.constant 0 : i32
    %c0_i32_0 = arith.constant 0 : i32
    return %arg0, %c0_i32 : i32, i32
  }
  func.func @transform_3(%arg0: i32, %arg1: i32) -> (i32, i32) {
    %c0_i32 = arith.constant 0 : i32
    %c0_i32_0 = arith.constant 0 : i32
    return %arg0, %c0_i32 : i32, i32
  }
  func.func @transform_4(%arg0: i32, %arg1: i32) -> (i32, i32) {
    %c0_i32 = arith.constant 0 : i32
    %c0_i32_0 = arith.constant 0 : i32
    return %arg0, %c0_i32 : i32, i32
  }
  func.func @transform_5(%arg0: i32, %arg1: i32) -> (i32, i32) {
    %c0_i32 = arith.constant 0 : i32
    %c0_i32_0 = arith.constant 0 : i32
    %c0_i32_1 = arith.constant 0 : i32
    return %c0_i32, %c0_i32_0 : i32, i32
  }
  func.func @transform_6(%arg0: i32, %arg1: i32) -> (i32, i32) {
    %c0_i32 = arith.constant 0 : i32
    %c0_i32_0 = arith.constant 0 : i32
    %c0_i32_1 = arith.constant 0 : i32
    return %c0_i32, %c0_i32_0 : i32, i32
  }
  func.func @transform_7(%arg0: i32, %arg1: i32) -> (i32, i32, i32) {
    %c0_i32 = arith.constant 0 : i32
    %c0_i32_0 = arith.constant 0 : i32
    return %arg1, %arg0, %c0_i32 : i32, i32, i32
  }
  func.func @transform_8(%arg0: i32, %arg1: i32) -> (i32, i32) {
    %c0_i32 = arith.constant 0 : i32
    %c0_i32_0 = arith.constant 0 : i32
    return %arg0, %c0_i32 : i32, i32
  }
  func.func @transform_9(%arg0: i32, %arg1: i32) -> (i32, i32) {
    %c0_i32 = arith.constant 0 : i32
    %c0_i32_0 = arith.constant 0 : i32
    return %arg0, %c0_i32 : i32, i32
  }
  func.func @transform_10(%arg0: i32, %arg1: i32) -> (i32, i32) {
    %c0_i32 = arith.constant 0 : i32
    %c0_i32_0 = arith.constant 0 : i32
    return %arg0, %c0_i32 : i32, i32
  }
  func.func @transform_11(%arg0: i32, %arg1: i32) -> (i32, i32) {
    %c0_i32 = arith.constant 0 : i32
    %c0_i32_0 = arith.constant 0 : i32
    return %arg0, %c0_i32 : i32, i32
  }
}

</mosaic_0001>

<llo_original>
// kernel: lsnn_sequence.1
$region0: #{lsnn_sequence.1}
  #allocation0 [shape = 'u32[]', space=smem, size = 0x4, offset = 0x4, fixed_abs, tag = 'smem constant byte address 0x4 - core index']
  #allocation1 [shape = 'u32[72,128]{1,0:T(1,128)}', space=vmem, size = 0x9000, scoped, tag = 'internal scratch']
  %s0 = inlined_call_operand.vmem [shape: f32[8,8,128], index: 0, kind: input, shape index: {}]
  %s1 = inlined_call_operand.vmem [shape: f32[8,128], index: 1, kind: input, shape index: {}]
  %s2 = inlined_call_operand.vmem [shape: f32[8,128], index: 2, kind: input, shape index: {}]
  %s3 = inlined_call_operand.vmem [shape: f32[8,128], index: 3, kind: input, shape index: {}]
  %s4 = inlined_call_operand.vmem [shape: f32[8,128], index: 4, kind: input, shape index: {}]
  %s5 = inlined_call_operand.hbm [shape: f32[128,128], index: 5, kind: input, shape index: {}]
  %s6 = inlined_call_operand.hbm [shape: f32[128,128], index: 6, kind: input, shape index: {}]
  %s7 = inlined_call_operand.vmem [shape: f32[8,8,128], index: 7, kind: output, shape index: {0}]
  %s8 = inlined_call_operand.vmem [shape: f32[8,128], index: 8, kind: output, shape index: {1}]
  %s9 = inlined_call_operand.vmem [shape: f32[8,128], index: 9, kind: output, shape index: {2}]
  %s10 = inlined_call_operand.vmem [shape: f32[8,128], index: 10, kind: output, shape index: {3}]
  %s11 = inlined_call_operand.vmem [shape: f32[8,128], index: 11, kind: output, shape index: {4}]
  %12 = xla_tuple %s7, %s8, %s9, %s10, %s11
  %s13 = sld [smem:[#allocation0]]
  $region105: #{lsnn_sequence.1} parent=0
    _
  %s15 = ssub.s32 1, %s13
  %s16 = scalar_select 0, %s15, %s13
  $region1: #{lsnn_sequence.1} parent=0
    #allocation2 [shape = 'u8[65536]{0}', space=vmem, size = 0x10000, scoped, tag = 'input window, operand 5, single buffered']
    #allocation3 [shape = 's32[2]{0}', space=sflag, size = 0x8, scoped, tag = 'scoped memory for lsnn_sequence.1']
    #allocation4 [shape = 'u8[65536]{0}', space=vmem, size = 0x10000, scoped, tag = 'input window, operand 6, single buffered']
    #allocation5 [shape = 's32[1]{0}', space=sflag, size = 0x4, scoped, tag = 'scoped memory for lsnn_sequence.1']
    %17 = vsyncpa [#allocation3], 0
    %18 = vsyncpa [#allocation5], 0
    loop: start=0, step=1, limit=4
    $region2: #{lsnn_sequence.1} parent=1 // loop_pre_header
      _
    $region3: #{lsnn_sequence.1} parent=1 // loop_header
      %s20 = sphi 0, %s24
      %p21 = scmp.ge.s32.totalorder %s20, 4
      %s27 = sphi 0, %s39
      %s28 = sphi 0, %s35
      %s29 = sphi 0, %s27
      %s30 = sphi 0, %s28
      %s31 = sphi 0, %s29
      %s32 = sphi 0, %s30
      %s44 = sphi 0, %s46
      %s47 = sphi 0, %s44
      %s48 = sphi 0, %s47
      %s64 = sphi 0, %s48
      %s70 = sphi 0, %s72
      %s73 = sphi 0, %s70
      %s74 = sphi 0, %s73
      %s90 = sphi 0, %s74
      %s96 = sphi 0, %s98
      %s99 = sphi 0, %s96
      %s100 = sphi 0, %s99
      %s116 = sphi 0, %s100
      %s122 = sphi 0, %s124
      %s125 = sphi 0, %s122
      %s126 = sphi 0, %s125
      %s142 = sphi 0, %s126
      %s148 = sphi 0, %s150
      %s151 = sphi 0, %s148
      %s152 = sphi 0, %s151
      %s168 = sphi 0, %s152
      %s172 = sphi 0, %s172
      %s174 = sphi 0, %s172
      %s175 = sphi 0, %s174
      %s189 = sphi 0, %s175
      %s193 = sphi 0, %s193
      %s195 = sphi 0, %s193
      %s196 = sphi 0, %s195
      %s210 = sphi 0, %s196
      %s218 = sphi 0, %s220
      %s221 = sphi 0, %s218
      %s222 = sphi 0, %s221
      %s238 = sphi 0, %s222
      %s244 = sphi 0, %s246
      %s247 = sphi 0, %s244
      %s248 = sphi 0, %s247
      %s264 = sphi 0, %s248
      %s270 = sphi 0, %s272
      %s273 = sphi 0, %s270
      %s274 = sphi 0, %s273
      %s290 = sphi 0, %s274
      %s296 = sphi 0, %s298
      %s299 = sphi 0, %s296
      %s300 = sphi 0, %s299
      %s316 = sphi 0, %s300
      %s322 = sphi 0, %s324
      %s325 = sphi 0, %s322
      %s326 = sphi 0, %s325
      %s342 = sphi 0, %s326
    $region4: #{lsnn_sequence.1} parent=1 // loop_header_branch
      %23 = sbr.rel (%p21) target = $region8
    $region5: #{lsnn_sequence.1} parent=1 // loop_body
      %s25 = ssub.s32 %s20, 1
      %s26 = ssub.s32 %s20, 2
      %s33 = sadd.s32 1, %s28
      %p34 = scmp.ge.s32.totalorder %s33, 2
      %s35 = scalar_select %p34, 0, %s33
      %s36 = sadd.s32 1, %s27
      %s37 = scalar_select %p34, %s36, %s27
      %p38 = scmp.ge.s32.totalorder %s37, 1
      %s39 = scalar_select %p38, 0, %s37
      %s40 = ssub.s32 %s28, %s35
      %s41 = ssub.s32 %s27, %s39
      %s42 = sor.u32 %s40, %s41
      %p43 = scmp.eq.s32.totalorder %s42, 0
      %s45 = sadd.s32 %s44, 1
      %s46 = scalar_select %p43, %s44, %s45
      %p49 = pneg %p43
      %p50 = scmp.eq.s32.totalorder %s20, 1
      %p51 = por %p49, %p50
      %p52 = scmp.ne.s32.totalorder %s44, %s47
      %p53 = scmp.eq.s32.totalorder %s20, 0
      %p54 = por %p52, %p53
      %p55 = scmp.ne.s32.totalorder %s44, %s47
      %p56 = scmp.eq.s32.totalorder %s25, 1
      %p57 = por %p55, %p56
      %p58 = scmp.ne.s32.totalorder %s47, %s48
      %p59 = scmp.eq.s32.totalorder %s25, 0
      %p60 = por %p58, %p59
      %p61 = scmp.ne.s32.totalorder %s47, %s48
      %p62 = scmp.eq.s32.totalorder %s26, 1
      %p63 = por %p61, %p62
      %p65 = scmp.ne.s32.totalorder %s48, %s64
      %p66 = scmp.eq.s32.totalorder %s26, 0
      %p67 = por %p65, %p66
      %s68 = ssub.s32 %s27, %s39
      %p69 = scmp.eq.s32.totalorder %s68, 0
      %s71 = sadd.s32 %s70, 1
      %s72 = scalar_select %p69, %s70, %s71
      %p75 = pneg %p69
      %p76 = scmp.eq.s32.totalorder %s20, 1
      %p77 = por %p75, %p76
      %p78 = scmp.ne.s32.totalorder %s70, %s73
      %p79 = scmp.eq.s32.totalorder %s20, 0
      %p80 = por %p78, %p79
      %p81 = scmp.ne.s32.totalorder %s70, %s73
      %p82 = scmp.eq.s32.totalorder %s25, 1
      %p83 = por %p81, %p82
      %p84 = scmp.ne.s32.totalorder %s73, %s74
      %p85 = scmp.eq.s32.totalorder %s25, 0
      %p86 = por %p84, %p85
      %p87 = scmp.ne.s32.totalorder %s73, %s74
      %p88 = scmp.eq.s32.totalorder %s26, 1
      %p89 = por %p87, %p88
      %p91 = scmp.ne.s32.totalorder %s74, %s90
      %p92 = scmp.eq.s32.totalorder %s26, 0
      %p93 = por %p91, %p92
      %s94 = ssub.s32 %s27, %s39
      %p95 = scmp.eq.s32.totalorder %s94, 0
      %s97 = sadd.s32 %s96, 1
      %s98 = scalar_select %p95, %s96, %s97
      %p101 = pneg %p95
      %p102 = scmp.eq.s32.totalorder %s20, 1
      %p103 = por %p101, %p102
      %p104 = scmp.ne.s32.totalorder %s96, %s99
      %p105 = scmp.eq.s32.totalorder %s20, 0
      %p106 = por %p104, %p105
      %p107 = scmp.ne.s32.totalorder %s96, %s99
      %p108 = scmp.eq.s32.totalorder %s25, 1
      %p109 = por %p107, %p108
      %p110 = scmp.ne.s32.totalorder %s99, %s100
      %p111 = scmp.eq.s32.totalorder %s25, 0
      %p112 = por %p110, %p111
      %p113 = scmp.ne.s32.totalorder %s99, %s100
      %p114 = scmp.eq.s32.totalorder %s26, 1
      %p115 = por %p113, %p114
      %p117 = scmp.ne.s32.totalorder %s100, %s116
      %p118 = scmp.eq.s32.totalorder %s26, 0
      %p119 = por %p117, %p118
      %s120 = ssub.s32 %s27, %s39
      %p121 = scmp.eq.s32.totalorder %s120, 0
      %s123 = sadd.s32 %s122, 1
      %s124 = scalar_select %p121, %s122, %s123
      %p127 = pneg %p121
      %p128 = scmp.eq.s32.totalorder %s20, 1
      %p129 = por %p127, %p128
      %p130 = scmp.ne.s32.totalorder %s122, %s125
      %p131 = scmp.eq.s32.totalorder %s20, 0
      %p132 = por %p130, %p131
      %p133 = scmp.ne.s32.totalorder %s122, %s125
      %p134 = scmp.eq.s32.totalorder %s25, 1
      %p135 = por %p133, %p134
      %p136 = scmp.ne.s32.totalorder %s125, %s126
      %p137 = scmp.eq.s32.totalorder %s25, 0
      %p138 = por %p136, %p137
      %p139 = scmp.ne.s32.totalorder %s125, %s126
      %p140 = scmp.eq.s32.totalorder %s26, 1
      %p141 = por %p139, %p140
      %p143 = scmp.ne.s32.totalorder %s126, %s142
      %p144 = scmp.eq.s32.totalorder %s26, 0
      %p145 = por %p143, %p144
      %s146 = ssub.s32 %s27, %s39
      %p147 = scmp.eq.s32.totalorder %s146, 0
      %s149 = sadd.s32 %s148, 1
      %s150 = scalar_select %p147, %s148, %s149
      %p153 = pneg %p147
      %p154 = scmp.eq.s32.totalorder %s20, 1
      %p155 = por %p153, %p154
      %p156 = scmp.ne.s32.totalorder %s148, %s151
      %p157 = scmp.eq.s32.totalorder %s20, 0
      %p158 = por %p156, %p157
      %p159 = scmp.ne.s32.totalorder %s148, %s151
      %p160 = scmp.eq.s32.totalorder %s25, 1
      %p161 = por %p159, %p160
      %p162 = scmp.ne.s32.totalorder %s151, %s152
      %p163 = scmp.eq.s32.totalorder %s25, 0
      %p164 = por %p162, %p163
      %p165 = scmp.ne.s32.totalorder %s151, %s152
      %p166 = scmp.eq.s32.totalorder %s26, 1
      %p167 = por %p165, %p166
      %p169 = scmp.ne.s32.totalorder %s152, %s168
      %p170 = scmp.eq.s32.totalorder %s26, 0
      %p171 = por %p169, %p170
      %s173 = sadd.s32 %s172, 1
      %p176 = scmp.eq.s32.totalorder %s20, 1
      %p177 = scmp.ne.s32.totalorder %s172, %s174
      %p178 = scmp.eq.s32.totalorder %s20, 0
      %p179 = por %p177, %p178
      %p180 = scmp.ne.s32.totalorder %s172, %s174
      %p181 = scmp.eq.s32.totalorder %s25, 1
      %p182 = por %p180, %p181
      %p183 = scmp.ne.s32.totalorder %s174, %s175
      %p184 = scmp.eq.s32.totalorder %s25, 0
      %p185 = por %p183, %p184
      %p186 = scmp.ne.s32.totalorder %s174, %s175
      %p187 = scmp.eq.s32.totalorder %s26, 1
      %p188 = por %p186, %p187
      %p190 = scmp.ne.s32.totalorder %s175, %s189
      %p191 = scmp.eq.s32.totalorder %s26, 0
      %p192 = por %p190, %p191
      %s194 = sadd.s32 %s193, 1
      %p197 = scmp.eq.s32.totalorder %s20, 1
      %p198 = scmp.ne.s32.totalorder %s193, %s195
      %p199 = scmp.eq.s32.totalorder %s20, 0
      %p200 = por %p198, %p199
      %p201 = scmp.ne.s32.totalorder %s193, %s195
      %p202 = scmp.eq.s32.totalorder %s25, 1
      %p203 = por %p201, %p202
      %p204 = scmp.ne.s32.totalorder %s195, %s196
      %p205 = scmp.eq.s32.totalorder %s25, 0
      %p206 = por %p204, %p205
      %p207 = scmp.ne.s32.totalorder %s195, %s196
      %p208 = scmp.eq.s32.totalorder %s26, 1
      %p209 = por %p207, %p208
      %p211 = scmp.ne.s32.totalorder %s196, %s210
      %p212 = scmp.eq.s32.totalorder %s26, 0
      %p213 = por %p211, %p212
      %s214 = ssub.s32 %s28, %s35
      %s215 = ssub.s32 %s27, %s39
      %s216 = sor.u32 %s214, %s215
      %p217 = scmp.eq.s32.totalorder %s216, 0
      %s219 = sadd.s32 %s218, 1
      %s220 = scalar_select %p217, %s218, %s219
      %p223 = pneg %p217
      %p224 = scmp.eq.s32.totalorder %s20, 1
      %p225 = por %p223, %p224
      %p226 = scmp.ne.s32.totalorder %s218, %s221
      %p227 = scmp.eq.s32.totalorder %s20, 0
      %p228 = por %p226, %p227
      %p229 = scmp.ne.s32.totalorder %s218, %s221
      %p230 = scmp.eq.s32.totalorder %s25, 1
      %p231 = por %p229, %p230
      %p232 = scmp.ne.s32.totalorder %s221, %s222
      %p233 = scmp.eq.s32.totalorder %s25, 0
      %p234 = por %p232, %p233
      %p235 = scmp.ne.s32.totalorder %s221, %s222
      %p236 = scmp.eq.s32.totalorder %s26, 1
      %p237 = por %p235, %p236
      %p239 = scmp.ne.s32.totalorder %s222, %s238
      %p240 = scmp.eq.s32.totalorder %s26, 0
      %p241 = por %p239, %p240
      %s242 = ssub.s32 %s27, %s39
      %p243 = scmp.eq.s32.totalorder %s242, 0
      %s245 = sadd.s32 %s244, 1
      %s246 = scalar_select %p243, %s244, %s245
      %p249 = pneg %p243
      %p250 = scmp.eq.s32.totalorder %s20, 1
      %p251 = por %p249, %p250
      %p252 = scmp.ne.s32.totalorder %s244, %s247
      %p253 = scmp.eq.s32.totalorder %s20, 0
      %p254 = por %p252, %p253
      %p255 = scmp.ne.s32.totalorder %s244, %s247
      %p256 = scmp.eq.s32.totalorder %s25, 1
      %p257 = por %p255, %p256
      %p258 = scmp.ne.s32.totalorder %s247, %s248
      %p259 = scmp.eq.s32.totalorder %s25, 0
      %p260 = por %p258, %p259
      %p261 = scmp.ne.s32.totalorder %s247, %s248
      %p262 = scmp.eq.s32.totalorder %s26, 1
      %p263 = por %p261, %p262
      %p265 = scmp.ne.s32.totalorder %s248, %s264
      %p266 = scmp.eq.s32.totalorder %s26, 0
      %p267 = por %p265, %p266
      %s268 = ssub.s32 %s27, %s39
      %p269 = scmp.eq.s32.totalorder %s268, 0
      %s271 = sadd.s32 %s270, 1
      %s272 = scalar_select %p269, %s270, %s271
      %p275 = pneg %p269
      %p276 = scmp.eq.s32.totalorder %s20, 1
      %p277 = por %p275, %p276
      %p278 = scmp.ne.s32.totalorder %s270, %s273
      %p279 = scmp.eq.s32.totalorder %s20, 0
      %p280 = por %p278, %p279
      %p281 = scmp.ne.s32.totalorder %s270, %s273
      %p282 = scmp.eq.s32.totalorder %s25, 1
      %p283 = por %p281, %p282
      %p284 = scmp.ne.s32.totalorder %s273, %s274
      %p285 = scmp.eq.s32.totalorder %s25, 0
      %p286 = por %p284, %p285
      %p287 = scmp.ne.s32.totalorder %s273, %s274
      %p288 = scmp.eq.s32.totalorder %s26, 1
      %p289 = por %p287, %p288
      %p291 = scmp.ne.s32.totalorder %s274, %s290
      %p292 = scmp.eq.s32.totalorder %s26, 0
      %p293 = por %p291, %p292
      %s294 = ssub.s32 %s27, %s39
      %p295 = scmp.eq.s32.totalorder %s294, 0
      %s297 = sadd.s32 %s296, 1
      %s298 = scalar_select %p295, %s296, %s297
      %p301 = pneg %p295
      %p302 = scmp.eq.s32.totalorder %s20, 1
      %p303 = por %p301, %p302
      %p304 = scmp.ne.s32.totalorder %s296, %s299
      %p305 = scmp.eq.s32.totalorder %s20, 0
      %p306 = por %p304, %p305
      %p307 = scmp.ne.s32.totalorder %s296, %s299
      %p308 = scmp.eq.s32.totalorder %s25, 1
      %p309 = por %p307, %p308
      %p310 = scmp.ne.s32.totalorder %s299, %s300
      %p311 = scmp.eq.s32.totalorder %s25, 0
      %p312 = por %p310, %p311
      %p313 = scmp.ne.s32.totalorder %s299, %s300
      %p314 = scmp.eq.s32.totalorder %s26, 1
      %p315 = por %p313, %p314
      %p317 = scmp.ne.s32.totalorder %s300, %s316
      %p318 = scmp.eq.s32.totalorder %s26, 0
      %p319 = por %p317, %p318
      %s320 = ssub.s32 %s27, %s39
      %p321 = scmp.eq.s32.totalorder %s320, 0
      %s323 = sadd.s32 %s322, 1
      %s324 = scalar_select %p321, %s322, %s323
      %p327 = pneg %p321
      %p328 = scmp.eq.s32.totalorder %s20, 1
      %p329 = por %p327, %p328
      %p330 = scmp.ne.s32.totalorder %s322, %s325
      %p331 = scmp.eq.s32.totalorder %s20, 0
      %p332 = por %p330, %p331
      %p333 = scmp.ne.s32.totalorder %s322, %s325
      %p334 = scmp.eq.s32.totalorder %s25, 1
      %p335 = por %p333, %p334
      %p336 = scmp.ne.s32.totalorder %s325, %s326
      %p337 = scmp.eq.s32.totalorder %s25, 0
      %p338 = por %p336, %p337
      %p339 = scmp.ne.s32.totalorder %s325, %s326
      %p340 = scmp.eq.s32.totalorder %s26, 1
      %p341 = por %p339, %p340
      %p343 = scmp.ne.s32.totalorder %s326, %s342
      %p344 = scmp.eq.s32.totalorder %s26, 0
      %p345 = por %p343, %p344
      %p346 = scmp.le.s32.totalorder 1, %s20
      %p347 = scmp.lt.s32.totalorder %s20, 3
      %p348 = pnand %p346, %p347
      %p349 = pneg %p348
      // Predicated region
      $region9: #{lsnn_sequence.1} parent=5 // pred_check
        _
      $region10: #{lsnn_sequence.1} parent=5 // pred_check_branch
        %351 = sbr.rel (%p348) target = $region12
      $region11: #{lsnn_sequence.1} parent=5 // pred_region
        %s352 = ssub.s32 %s20, 1
        // Predicated region
        $region13: #{lsnn_sequence.1} parent=11 // pred_check
          %p353 = pneg %p86
        $region14: #{lsnn_sequence.1} parent=11 // pred_check_branch
          %355 = sbr.rel (%p353) target = $region16
        $region15: #{lsnn_sequence.1} parent=11 // pred_region
          %p356 = scmp.lt.s32.totalorder %s29, 0
          %s357 = scalar_select %p356, %s29, 0
          %s358 = smul.addr %s357, 8
          %s359 = scalar_lea.vmem %s1, %s358
        $region16: #{lsnn_sequence.1} parent=11 // pred_fallthru
          _
        // Predicated region
        $region17: #{lsnn_sequence.1} parent=11 // pred_check
          %p360 = pneg %p112
        $region18: #{lsnn_sequence.1} parent=11 // pred_check_branch
          %362 = sbr.rel (%p360) target = $region20
        $region19: #{lsnn_sequence.1} parent=11 // pred_region
          %p363 = scmp.lt.s32.totalorder %s29, 0
          %s364 = scalar_select %p363, %s29, 0
          %s365 = smul.addr %s364, 8
          %s366 = scalar_lea.vmem %s2, %s365
        $region20: #{lsnn_sequence.1} parent=11 // pred_fallthru
          _
        // Predicated region
        $region21: #{lsnn_sequence.1} parent=11 // pred_check
          %p367 = pneg %p138
        $region22: #{lsnn_sequence.1} parent=11 // pred_check_branch
          %369 = sbr.rel (%p367) target = $region24
        $region23: #{lsnn_sequence.1} parent=11 // pred_region
          %p370 = scmp.lt.s32.totalorder %s29, 0
          %s371 = scalar_select %p370, %s29, 0
          %s372 = smul.addr %s371, 8
          %s373 = scalar_lea.vmem %s3, %s372
        $region24: #{lsnn_sequence.1} parent=11 // pred_fallthru
          _
        // Predicated region
        $region25: #{lsnn_sequence.1} parent=11 // pred_check
          %p374 = pneg %p164
        $region26: #{lsnn_sequence.1} parent=11 // pred_check_branch
          %376 = sbr.rel (%p374) target = $region28
        $region27: #{lsnn_sequence.1} parent=11 // pred_region
          %p377 = scmp.lt.s32.totalorder %s29, 0
          %s378 = scalar_select %p377, %s29, 0
          %s379 = smul.addr %s378, 8
          %s380 = scalar_lea.vmem %s4, %s379
        $region28: #{lsnn_sequence.1} parent=11 // pred_fallthru
          _
        // Predicated region
        $region29: #{lsnn_sequence.1} parent=11 // pred_check
          %p381 = pneg %p185
        $region30: #{lsnn_sequence.1} parent=11 // pred_check_branch
          %383 = sbr.rel (%p381) target = $region32
        $region31: #{lsnn_sequence.1} parent=11 // pred_region
          %385 = vsyncadd [#allocation3], 0
          %s386 = sshll.u32 %s5, 4
          %s387 = int_to_ptr.hbm [resolvable:$true] %s386
          %s388 = sshll.u32 [#allocation2], 4
          %s389 = int_to_ptr.vmem [resolvable:$true] %s388
          %394 = dma.hbm_to_vmem [thread:$0]  %s387, 2048, %s389, [#allocation3], 128, 128, 8
        $region32: #{lsnn_sequence.1} parent=11 // pred_fallthru
          _
        // Predicated region
        $region33: #{lsnn_sequence.1} parent=11 // pred_check
          %p395 = pneg %p206
        $region34: #{lsnn_sequence.1} parent=11 // pred_check_branch
          %397 = sbr.rel (%p395) target = $region36
        $region35: #{lsnn_sequence.1} parent=11 // pred_region
          %399 = vsyncadd [#allocation5], 0
          %s400 = sshll.u32 %s6, 4
          %s401 = int_to_ptr.hbm [resolvable:$true] %s400
          %s402 = sshll.u32 [#allocation4], 4
          %s403 = int_to_ptr.vmem [resolvable:$true] %s402
          %408 = dma.hbm_to_vmem [thread:$0]  %s401, 2048, %s403, [#allocation5], 128, 128, 8
        $region36: #{lsnn_sequence.1} parent=11 // pred_fallthru
          _
      $region12: #{lsnn_sequence.1} parent=5 // pred_fallthru
        _
      %p409 = scmp.lt.s32.totalorder %s20, 2
      // Predicated region
      $region37: #{lsnn_sequence.1} parent=5 // pred_check
        %p410 = pneg %p409
      $region38: #{lsnn_sequence.1} parent=5 // pred_check_branch
        %412 = sbr.rel (%p410) target = $region40
      $region39: #{lsnn_sequence.1} parent=5 // pred_region
        // Predicated region
        $region41: #{lsnn_sequence.1} parent=39 // pred_check
          %p413 = pneg %p54
        $region42: #{lsnn_sequence.1} parent=39 // pred_check_branch
          %415 = sbr.rel (%p413) target = $region44
        $region43: #{lsnn_sequence.1} parent=39 // pred_region
          %s416 = smul.u32 4, %s28
          %p417 = scmp.lt.s32.totalorder %s416, 7
          %s418 = scalar_select %p417, %s416, 7
          %p419 = scmp.lt.s32.totalorder %s27, 0
          %s420 = scalar_select %p419, %s27, 0
          %s421 = sadd.s32 %s420, %s418
          %s422 = smul.addr %s421, 8
          %s423 = scalar_lea.vmem %s0, %s422
          %s424 = smul.u32 4, %s28
        $region44: #{lsnn_sequence.1} parent=39 // pred_fallthru
          _
      $region40: #{lsnn_sequence.1} parent=5 // pred_fallthru
        _
      %p425 = scmp.le.s32.totalorder 1, %s20
      %p426 = scmp.lt.s32.totalorder %s20, 3
      %p427 = pnand %p425, %p426
      %p428 = pneg %p427
      // Predicated region
      $region45: #{lsnn_sequence.1} parent=5 // pred_check
        _
      $region46: #{lsnn_sequence.1} parent=5 // pred_check_branch
        %430 = sbr.rel (%p427) target = $region48
      $region47: #{lsnn_sequence.1} parent=5 // pred_region
        %s431 = ssub.s32 %s20, 1
        // Predicated region
        $region49: #{lsnn_sequence.1} parent=47 // pred_check
          %p432 = pneg %p185
        $region50: #{lsnn_sequence.1} parent=47 // pred_check_branch
          %434 = sbr.rel (%p432) target = $region52
        $region51: #{lsnn_sequence.1} parent=47 // pred_region
          %436 = dma.done [#allocation3], 2048
        $region52: #{lsnn_sequence.1} parent=47 // pred_fallthru
          _
        // Predicated region
        $region53: #{lsnn_sequence.1} parent=47 // pred_check
          %p437 = pneg %p206
        $region54: #{lsnn_sequence.1} parent=47 // pred_check_branch
          %439 = sbr.rel (%p437) target = $region56
        $region55: #{lsnn_sequence.1} parent=47 // pred_region
          %441 = dma.done [#allocation5], 2048
        $region56: #{lsnn_sequence.1} parent=47 // pred_fallthru
          _
        %s442 = smul.u32 4, %s30
        %p443 = scmp.lt.s32.totalorder %s442, 7
        %s444 = scalar_select %p443, %s442, 7
        %p445 = scmp.lt.s32.totalorder %s29, 0
        %s446 = scalar_select %p445, %s29, 0
        %s447 = sadd.s32 %s446, %s444
        %s448 = smul.addr %s447, 8
        %s449 = scalar_lea.vmem %s0, %s448
        %p450 = pneg %p60
        %p451 = pneg %p57
        %p452 = scmp.lt.s32.totalorder %s29, 0
        %s453 = scalar_select %p452, %s29, 0
        %s454 = smul.addr %s453, 8
        %s455 = scalar_lea.vmem %s1, %s454
        %p456 = pneg %p86
        %p457 = pneg %p83
        %p458 = scmp.lt.s32.totalorder %s29, 0
        %s459 = scalar_select %p458, %s29, 0
        %s460 = smul.addr %s459, 8
        %s461 = scalar_lea.vmem %s2, %s460
        %p462 = pneg %p112
        %p463 = pneg %p109
        %p464 = scmp.lt.s32.totalorder %s29, 0
        %s465 = scalar_select %p464, %s29, 0
        %s466 = smul.addr %s465, 8
        %s467 = scalar_lea.vmem %s3, %s466
        %p468 = pneg %p138
        %p469 = pneg %p135
        %p470 = scmp.lt.s32.totalorder %s29, 0
        %s471 = scalar_select %p470, %s29, 0
        %s472 = smul.addr %s471, 8
        %s473 = scalar_lea.vmem %s4, %s472
        %p474 = pneg %p164
        %p475 = pneg %p161
        %p476 = pneg %p185
        %p477 = pneg %p182
        %p478 = pneg %p206
        %p479 = pneg %p203
        %p480 = pneg %p234
        %p481 = pneg %p231
        %s482 = smul.u32 4, %s30
        %p483 = scmp.lt.s32.totalorder %s482, 7
        %s484 = scalar_select %p483, %s482, 7
        %p485 = scmp.lt.s32.totalorder %s29, 0
        %s486 = scalar_select %p485, %s29, 0
        %s487 = sadd.s32 %s486, %s484
        %s488 = smul.addr %s487, 8
        %s489 = scalar_lea.vmem %s7, %s488
        %p490 = pneg %p260
        %p491 = pneg %p257
        %p492 = scmp.lt.s32.totalorder %s29, 0
        %s493 = scalar_select %p492, %s29, 0
        %s494 = smul.addr %s493, 8
        %s495 = scalar_lea.vmem %s8, %s494
        %p496 = pneg %p286
        %p497 = pneg %p283
        %p498 = scmp.lt.s32.totalorder %s29, 0
        %s499 = scalar_select %p498, %s29, 0
        %s500 = smul.addr %s499, 8
        %s501 = scalar_lea.vmem %s9, %s500
        %p502 = pneg %p312
        %p503 = pneg %p309
        %p504 = scmp.lt.s32.totalorder %s29, 0
        %s505 = scalar_select %p504, %s29, 0
        %s506 = smul.addr %s505, 8
        %s507 = scalar_lea.vmem %s10, %s506
        %p508 = pneg %p338
        %p509 = pneg %p335
        %p510 = scmp.lt.s32.totalorder %s29, 0
        %s511 = scalar_select %p510, %s29, 0
        %s512 = smul.addr %s511, 8
        %s513 = scalar_lea.vmem %s11, %s512
        %s514 = smul.u32 4, %s30
        %p515 = scmp.lt.s32.totalorder %s514, 7
        %s516 = scalar_select %p515, %s514, 7
        %p517 = scmp.lt.s32.totalorder %s29, 0
        %s518 = scalar_select %p517, %s29, 0
        %s519 = sadd.s32 %s518, %s516
        %s520 = smul.addr %s519, 8
        %s521 = scalar_lea.vmem %s0, %s520
        %s522 = smul.u32 4, %s30
        %p523 = scmp.lt.s32.totalorder %s29, 0
        %s524 = scalar_select %p523, %s29, 0
        %s525 = smul.addr %s524, 8
        %s526 = scalar_lea.vmem %s1, %s525
        %p527 = scmp.lt.s32.totalorder %s29, 0
        %s528 = scalar_select %p527, %s29, 0
        %s529 = smul.addr %s528, 8
        %s530 = scalar_lea.vmem %s2, %s529
        %p531 = scmp.lt.s32.totalorder %s29, 0
        %s532 = scalar_select %p531, %s29, 0
        %s533 = smul.addr %s532, 8
        %s534 = scalar_lea.vmem %s3, %s533
        %p535 = scmp.lt.s32.totalorder %s29, 0
        %s536 = scalar_select %p535, %s29, 0
        %s537 = smul.addr %s536, 8
        %s538 = scalar_lea.vmem %s4, %s537
        %s539 = smul.u32 4, %s30
        %p540 = scmp.lt.s32.totalorder %s539, 7
        %s541 = scalar_select %p540, %s539, 7
        %p542 = scmp.lt.s32.totalorder %s29, 0
        %s543 = scalar_select %p542, %s29, 0
        %s544 = sadd.s32 %s543, %s541
        %s545 = smul.addr %s544, 8
        %s546 = scalar_lea.vmem %s7, %s545
        %s547 = smul.u32 4, %s30
        %p548 = scmp.lt.s32.totalorder %s29, 0
        %s549 = scalar_select %p548, %s29, 0
        %s550 = smul.addr %s549, 8
        %s551 = scalar_lea.vmem %s8, %s550
        %p552 = scmp.lt.s32.totalorder %s29, 0
        %s553 = scalar_select %p552, %s29, 0
        %s554 = smul.addr %s553, 8
        %s555 = scalar_lea.vmem %s9, %s554
        %p556 = scmp.lt.s32.totalorder %s29, 0
        %s557 = scalar_select %p556, %s29, 0
        %s558 = smul.addr %s557, 8
        %s559 = scalar_lea.vmem %s10, %s558
        %p560 = scmp.lt.s32.totalorder %s29, 0
        %s561 = scalar_select %p560, %s29, 0
        %s562 = smul.addr %s561, 8
        %s563 = scalar_lea.vmem %s11, %s562
        %p564 = scmp.eq.s32.totalorder %s30, 0
        // Predicated region
        $region57: #{lsnn_sequence.1} parent=47 // pred_check
          %p565 = pneg %p564
        $region58: #{lsnn_sequence.1} parent=47 // pred_check_branch
          %567 = sbr.rel (%p565) target = $region60
        $region59: #{lsnn_sequence.1} parent=47 // pred_region
          %v568 = vld [vmem:[%s526] sm:$0xff]
          %569 = vst [vmem:[%s551] sm:$0xff] %v568
          %v570 = vld [vmem:[%s530] sm:$0xff]
          %571 = vst [vmem:[%s555] sm:$0xff] %v570
          %v572 = vld [vmem:[%s534] sm:$0xff]
          %573 = vst [vmem:[%s559] sm:$0xff] %v572
          %v574 = vld [vmem:[%s538] sm:$0xff]
          %575 = vst [vmem:[%s563] sm:$0xff] %v574
        $region60: #{lsnn_sequence.1} parent=47 // pred_fallthru
          _
        %v576 = vld [vmem:[%s551] sm:$0xff]
        %v577 = vld [vmem:[%s555] sm:$0xff]
        %v578 = vld [vmem:[%s559] sm:$0xff]
        %v579 = vld [vmem:[%s563] sm:$0xff]
        %v580 = vld [vmem:[%s521] sm:$0xff]
        %v581 = vld [vmem:[#allocation2] sm:$0xff]
        %v582 = vld [vmem:[#allocation2 + $0x8] sm:$0xff]
        %v583 = vld [vmem:[#allocation2 + $0x10] sm:$0xff]
        %v584 = vld [vmem:[#allocation2 + $0x18] sm:$0xff]
        %v585 = vld [vmem:[#allocation2 + $0x20] sm:$0xff]
        %v586 = vld [vmem:[#allocation2 + $0x28] sm:$0xff]
        %v587 = vld [vmem:[#allocation2 + $0x30] sm:$0xff]
        %v588 = vld [vmem:[#allocation2 + $0x38] sm:$0xff]
        %v589 = vld [vmem:[#allocation2 + $0x40] sm:$0xff]
        %v590 = vld [vmem:[#allocation2 + $0x48] sm:$0xff]
        %v591 = vld [vmem:[#allocation2 + $0x50] sm:$0xff]
        %v592 = vld [vmem:[#allocation2 + $0x58] sm:$0xff]
        %v593 = vld [vmem:[#allocation2 + $0x60] sm:$0xff]
        %v594 = vld [vmem:[#allocation2 + $0x68] sm:$0xff]
        %v595 = vld [vmem:[#allocation2 + $0x70] sm:$0xff]
        %v596 = vld [vmem:[#allocation2 + $0x78] sm:$0xff]
        %v597 = vld [vmem:[#allocation4] sm:$0xff]
        %v598 = vld [vmem:[#allocation4 + $0x8] sm:$0xff]
        %v599 = vld [vmem:[#allocation4 + $0x10] sm:$0xff]
        %v600 = vld [vmem:[#allocation4 + $0x18] sm:$0xff]
        %v601 = vld [vmem:[#allocation4 + $0x20] sm:$0xff]
        %v602 = vld [vmem:[#allocation4 + $0x28] sm:$0xff]
        %v603 = vld [vmem:[#allocation4 + $0x30] sm:$0xff]
        %v604 = vld [vmem:[#allocation4 + $0x38] sm:$0xff]
        %v605 = vld [vmem:[#allocation4 + $0x40] sm:$0xff]
        %v606 = vld [vmem:[#allocation4 + $0x48] sm:$0xff]
        %v607 = vld [vmem:[#allocation4 + $0x50] sm:$0xff]
        %v608 = vld [vmem:[#allocation4 + $0x58] sm:$0xff]
        %v609 = vld [vmem:[#allocation4 + $0x60] sm:$0xff]
        %v610 = vld [vmem:[#allocation4 + $0x68] sm:$0xff]
        %v611 = vld [vmem:[#allocation4 + $0x70] sm:$0xff]
        %v612 = vld [vmem:[#allocation4 + $0x78] sm:$0xff]
        %613 = vmatpush.msra.mxu0 %v612
        %614 = vmatpush.msra.mxu0 %v611
        %615 = vmatpush.msra.mxu0 %v610
        %616 = vmatpush.msra.mxu0 %v609
        %617 = vmatpush.msra.mxu0 %v608
        %618 = vmatpush.msra.mxu0 %v607
        %619 = vmatpush.msra.mxu0 %v606
        %620 = vmatpush.msra.mxu0 %v605
        %621 = vmatpush.msra.mxu0 %v604
        %622 = vmatpush.msra.mxu0 %v603
        %623 = vmatpush.msra.mxu0 %v602
        %624 = vmatpush.msra.mxu0 %v601
        %625 = vmatpush.msra.mxu0 %v600
        %626 = vmatpush.msra.mxu0 %v599
        %627 = vmatpush.msra.mxu0 %v598
        %628 = vmatpush.msra.mxu0 %v597
        %629 = vmatmul.f32.gmra.mxu0 %v576
        %v630 = vpop.f32.mrf.mxu0
        %v631 = vadd.f32 0.0, %v630
        %632 = vdwg.mxu0
        %633 = vmatpush.msra.mxu0 %v596
        %634 = vmatpush.msra.mxu0 %v595
        %635 = vmatpush.msra.mxu0 %v594
        %636 = vmatpush.msra.mxu0 %v593
        %637 = vmatpush.msra.mxu0 %v592
        %638 = vmatpush.msra.mxu0 %v591
        %639 = vmatpush.msra.mxu0 %v590
        %640 = vmatpush.msra.mxu0 %v589
        %641 = vmatpush.msra.mxu0 %v588
        %642 = vmatpush.msra.mxu0 %v587
        %643 = vmatpush.msra.mxu0 %v586
        %644 = vmatpush.msra.mxu0 %v585
        %645 = vmatpush.msra.mxu0 %v584
        %646 = vmatpush.msra.mxu0 %v583
        %647 = vmatpush.msra.mxu0 %v582
        %648 = vmatpush.msra.mxu0 %v581
        %649 = vmatmul.f32.gmra.mxu0 %v580
        %v650 = vpop.f32.mrf.mxu0
        %v651 = vadd.f32 %v631, %v650
        %652 = vdwg.mxu0
        %v653 = vsub.f32 0.0, %v577
        %v654 = vadd.f32 %v653, %v578
        %v655 = vmul.f32 %v654, 0.1
        %v656 = vadd.f32 %v577, %v655
        %v657 = vmul.f32 %v578, 0.2
        %v658 = vsub.f32 %v578, %v657
        %v659 = vmul.f32 %v579, 1.4285714e-06
        %v660 = vsub.f32 %v579, %v659
        %v661 = vsub.f32 %v656, 1.0
        %v662 = vadd.f32 %v661, %v660
        %vm663 = vcmp.gt.f32.partialorder %v662, 0.0
        %v664 = vsel %vm663, 1, 0
        %v665 = vcvt.s32.f32 %v664
        %v666 = vsub.f32 1.0, %v665
        %v667 = vmul.f32 %v666, %v656
        %v668 = vmul.f32 %v665, 0.0
        %v669 = vadd.f32 %v667, %v668
        %v670 = vadd.f32 %v658, %v651
        %v671 = vmul.f32 %v665, 1.8
        %v672 = vadd.f32 %v660, %v671
        %673 = vst [vmem:[%s546] sm:$0xff] %v665
        %s674 = scalar_lea.vmem %s521, 8
        %v675 = vld [vmem:[%s674] sm:$0xff]
        %v676 = vld [vmem:[#allocation2] sm:$0xff]
        %v677 = vld [vmem:[#allocation2 + $0x8] sm:$0xff]
        %v678 = vld [vmem:[#allocation2 + $0x10] sm:$0xff]
        %v679 = vld [vmem:[#allocation2 + $0x18] sm:$0xff]
        %v680 = vld [vmem:[#allocation2 + $0x20] sm:$0xff]
        %v681 = vld [vmem:[#allocation2 + $0x28] sm:$0xff]
        %v682 = vld [vmem:[#allocation2 + $0x30] sm:$0xff]
        %v683 = vld [vmem:[#allocation2 + $0x38] sm:$0xff]
        %v684 = vld [vmem:[#allocation2 + $0x40] sm:$0xff]
        %v685 = vld [vmem:[#allocation2 + $0x48] sm:$0xff]
        %v686 = vld [vmem:[#allocation2 + $0x50] sm:$0xff]
        %v687 = vld [vmem:[#allocation2 + $0x58] sm:$0xff]
        %v688 = vld [vmem:[#allocation2 + $0x60] sm:$0xff]
        %v689 = vld [vmem:[#allocation2 + $0x68] sm:$0xff]
        %v690 = vld [vmem:[#allocation2 + $0x70] sm:$0xff]
        %v691 = vld [vmem:[#allocation2 + $0x78] sm:$0xff]
        %v692 = vld [vmem:[#allocation4] sm:$0xff]
        %v693 = vld [vmem:[#allocation4 + $0x8] sm:$0xff]
        %v694 = vld [vmem:[#allocation4 + $0x10] sm:$0xff]
        %v695 = vld [vmem:[#allocation4 + $0x18] sm:$0xff]
        %v696 = vld [vmem:[#allocation4 + $0x20] sm:$0xff]
        %v697 = vld [vmem:[#allocation4 + $0x28] sm:$0xff]
        %v698 = vld [vmem:[#allocation4 + $0x30] sm:$0xff]
        %v699 = vld [vmem:[#allocation4 + $0x38] sm:$0xff]
        %v700 = vld [vmem:[#allocation4 + $0x40] sm:$0xff]
        %v701 = vld [vmem:[#allocation4 + $0x48] sm:$0xff]
        %v702 = vld [vmem:[#allocation4 + $0x50] sm:$0xff]
        %v703 = vld [vmem:[#allocation4 + $0x58] sm:$0xff]
        %v704 = vld [vmem:[#allocation4 + $0x60] sm:$0xff]
        %v705 = vld [vmem:[#allocation4 + $0x68] sm:$0xff]
        %v706 = vld [vmem:[#allocation4 + $0x70] sm:$0xff]
        %v707 = vld [vmem:[#allocation4 + $0x78] sm:$0xff]
        %708 = vmatpush.msra.mxu0 %v707
        %709 = vmatpush.msra.mxu0 %v706
        %710 = vmatpush.msra.mxu0 %v705
        %711 = vmatpush.msra.mxu0 %v704
        %712 = vmatpush.msra.mxu0 %v703
        %713 = vmatpush.msra.mxu0 %v702
        %714 = vmatpush.msra.mxu0 %v701
        %715 = vmatpush.msra.mxu0 %v700
        %716 = vmatpush.msra.mxu0 %v699
        %717 = vmatpush.msra.mxu0 %v698
        %718 = vmatpush.msra.mxu0 %v697
        %719 = vmatpush.msra.mxu0 %v696
        %720 = vmatpush.msra.mxu0 %v695
        %721 = vmatpush.msra.mxu0 %v694
        %722 = vmatpush.msra.mxu0 %v693
        %723 = vmatpush.msra.mxu0 %v692
        %724 = vmatmul.f32.gmra.mxu0 %v665
        %v725 = vpop.f32.mrf.mxu0
        %v726 = vadd.f32 0.0, %v725
        %727 = vdwg.mxu0
        %728 = vmatpush.msra.mxu0 %v691
        %729 = vmatpush.msra.mxu0 %v690
        %730 = vmatpush.msra.mxu0 %v689
        %731 = vmatpush.msra.mxu0 %v688
        %732 = vmatpush.msra.mxu0 %v687
        %733 = vmatpush.msra.mxu0 %v686
        %734 = vmatpush.msra.mxu0 %v685
        %735 = vmatpush.msra.mxu0 %v684
        %736 = vmatpush.msra.mxu0 %v683
        %737 = vmatpush.msra.mxu0 %v682
        %738 = vmatpush.msra.mxu0 %v681
        %739 = vmatpush.msra.mxu0 %v680
        %740 = vmatpush.msra.mxu0 %v679
        %741 = vmatpush.msra.mxu0 %v678
        %742 = vmatpush.msra.mxu0 %v677
        %743 = vmatpush.msra.mxu0 %v676
        %744 = vmatmul.f32.gmra.mxu0 %v675
        %v745 = vpop.f32.mrf.mxu0
        %v746 = vadd.f32 %v726, %v745
        %747 = vdwg.mxu0
        %v748 = vsub.f32 0.0, %v669
        %v749 = vadd.f32 %v748, %v670
        %v750 = vmul.f32 %v749, 0.1
        %v751 = vadd.f32 %v669, %v750
        %v752 = vmul.f32 %v670, 0.2
        %v753 = vsub.f32 %v670, %v752
        %v754 = vmul.f32 %v672, 1.4285714e-06
        %v755 = vsub.f32 %v672, %v754
        %v756 = vsub.f32 %v751, 1.0
        %v757 = vadd.f32 %v756, %v755
        %vm758 = vcmp.gt.f32.partialorder %v757, 0.0
        %v759 = vsel %vm758, 1, 0
        %v760 = vcvt.s32.f32 %v759
        %v761 = vsub.f32 1.0, %v760
        %v762 = vmul.f32 %v761, %v751
        %v763 = vmul.f32 %v760, 0.0
        %v764 = vadd.f32 %v762, %v763
        %v765 = vadd.f32 %v753, %v746
        %v766 = vmul.f32 %v760, 1.8
        %v767 = vadd.f32 %v755, %v766
        %s768 = scalar_lea.vmem %s546, 8
        %769 = vst [vmem:[%s768] sm:$0xff] %v760
        %s770 = scalar_lea.vmem %s521, 16
        %v771 = vld [vmem:[%s770] sm:$0xff]
        %v772 = vld [vmem:[#allocation2] sm:$0xff]
        %v773 = vld [vmem:[#allocation2 + $0x8] sm:$0xff]
        %v774 = vld [vmem:[#allocation2 + $0x10] sm:$0xff]
        %v775 = vld [vmem:[#allocation2 + $0x18] sm:$0xff]
        %v776 = vld [vmem:[#allocation2 + $0x20] sm:$0xff]
        %v777 = vld [vmem:[#allocation2 + $0x28] sm:$0xff]
        %v778 = vld [vmem:[#allocation2 + $0x30] sm:$0xff]
        %v779 = vld [vmem:[#allocation2 + $0x38] sm:$0xff]
        %v780 = vld [vmem:[#allocation2 + $0x40] sm:$0xff]
        %v781 = vld [vmem:[#allocation2 + $0x48] sm:$0xff]
        %v782 = vld [vmem:[#allocation2 + $0x50] sm:$0xff]
        %v783 = vld [vmem:[#allocation2 + $0x58] sm:$0xff]
        %v784 = vld [vmem:[#allocation2 + $0x60] sm:$0xff]
        %v785 = vld [vmem:[#allocation2 + $0x68] sm:$0xff]
        %v786 = vld [vmem:[#allocation2 + $0x70] sm:$0xff]
        %v787 = vld [vmem:[#allocation2 + $0x78] sm:$0xff]
        %v788 = vld [vmem:[#allocation4] sm:$0xff]
        %v789 = vld [vmem:[#allocation4 + $0x8] sm:$0xff]
        %v790 = vld [vmem:[#allocation4 + $0x10] sm:$0xff]
        %v791 = vld [vmem:[#allocation4 + $0x18] sm:$0xff]
        %v792 = vld [vmem:[#allocation4 + $0x20] sm:$0xff]
        %v793 = vld [vmem:[#allocation4 + $0x28] sm:$0xff]
        %v794 = vld [vmem:[#allocation4 + $0x30] sm:$0xff]
        %v795 = vld [vmem:[#allocation4 + $0x38] sm:$0xff]
        %v796 = vld [vmem:[#allocation4 + $0x40] sm:$0xff]
        %v797 = vld [vmem:[#allocation4 + $0x48] sm:$0xff]
        %v798 = vld [vmem:[#allocation4 + $0x50] sm:$0xff]
        %v799 = vld [vmem:[#allocation4 + $0x58] sm:$0xff]
        %v800 = vld [vmem:[#allocation4 + $0x60] sm:$0xff]
        %v801 = vld [vmem:[#allocation4 + $0x68] sm:$0xff]
        %v802 = vld [vmem:[#allocation4 + $0x70] sm:$0xff]
        %v803 = vld [vmem:[#allocation4 + $0x78] sm:$0xff]
        %804 = vmatpush.msra.mxu0 %v803
        %805 = vmatpush.msra.mxu0 %v802
        %806 = vmatpush.msra.mxu0 %v801
        %807 = vmatpush.msra.mxu0 %v800
        %808 = vmatpush.msra.mxu0 %v799
        %809 = vmatpush.msra.mxu0 %v798
        %810 = vmatpush.msra.mxu0 %v797
        %811 = vmatpush.msra.mxu0 %v796
        %812 = vmatpush.msra.mxu0 %v795
        %813 = vmatpush.msra.mxu0 %v794
        %814 = vmatpush.msra.mxu0 %v793
        %815 = vmatpush.msra.mxu0 %v792
        %816 = vmatpush.msra.mxu0 %v791
        %817 = vmatpush.msra.mxu0 %v790
        %818 = vmatpush.msra.mxu0 %v789
        %819 = vmatpush.msra.mxu0 %v788
        %820 = vmatmul.f32.gmra.mxu0 %v760
        %v821 = vpop.f32.mrf.mxu0
        %v822 = vadd.f32 0.0, %v821
        %823 = vdwg.mxu0
        %824 = vmatpush.msra.mxu0 %v787
        %825 = vmatpush.msra.mxu0 %v786
        %826 = vmatpush.msra.mxu0 %v785
        %827 = vmatpush.msra.mxu0 %v784
        %828 = vmatpush.msra.mxu0 %v783
        %829 = vmatpush.msra.mxu0 %v782
        %830 = vmatpush.msra.mxu0 %v781
        %831 = vmatpush.msra.mxu0 %v780
        %832 = vmatpush.msra.mxu0 %v779
        %833 = vmatpush.msra.mxu0 %v778
        %834 = vmatpush.msra.mxu0 %v777
        %835 = vmatpush.msra.mxu0 %v776
        %836 = vmatpush.msra.mxu0 %v775
        %837 = vmatpush.msra.mxu0 %v774
        %838 = vmatpush.msra.mxu0 %v773
        %839 = vmatpush.msra.mxu0 %v772
        %840 = vmatmul.f32.gmra.mxu0 %v771
        %v841 = vpop.f32.mrf.mxu0
        %v842 = vadd.f32 %v822, %v841
        %843 = vdwg.mxu0
        %v844 = vsub.f32 0.0, %v764
        %v845 = vadd.f32 %v844, %v765
        %v846 = vmul.f32 %v845, 0.1
        %v847 = vadd.f32 %v764, %v846
        %v848 = vmul.f32 %v765, 0.2
        %v849 = vsub.f32 %v765, %v848
        %v850 = vmul.f32 %v767, 1.4285714e-06
        %v851 = vsub.f32 %v767, %v850
        %v852 = vsub.f32 %v847, 1.0
        %v853 = vadd.f32 %v852, %v851
        %vm854 = vcmp.gt.f32.partialorder %v853, 0.0
        %v855 = vsel %vm854, 1, 0
        %v856 = vcvt.s32.f32 %v855
        %v857 = vsub.f32 1.0, %v856
        %v858 = vmul.f32 %v857, %v847
        %v859 = vmul.f32 %v856, 0.0
        %v860 = vadd.f32 %v858, %v859
        %v861 = vadd.f32 %v849, %v842
        %v862 = vmul.f32 %v856, 1.8
        %v863 = vadd.f32 %v851, %v862
        %s864 = scalar_lea.vmem %s546, 16
        %865 = vst [vmem:[%s864] sm:$0xff] %v856
        %s866 = scalar_lea.vmem %s521, 24
        %v867 = vld [vmem:[%s866] sm:$0xff]
        %v868 = vld [vmem:[#allocation2] sm:$0xff]
        %v869 = vld [vmem:[#allocation2 + $0x8] sm:$0xff]
        %v870 = vld [vmem:[#allocation2 + $0x10] sm:$0xff]
        %v871 = vld [vmem:[#allocation2 + $0x18] sm:$0xff]
        %v872 = vld [vmem:[#allocation2 + $0x20] sm:$0xff]
        %v873 = vld [vmem:[#allocation2 + $0x28] sm:$0xff]
        %v874 = vld [vmem:[#allocation2 + $0x30] sm:$0xff]
        %v875 = vld [vmem:[#allocation2 + $0x38] sm:$0xff]
        %v876 = vld [vmem:[#allocation2 + $0x40] sm:$0xff]
        %v877 = vld [vmem:[#allocation2 + $0x48] sm:$0xff]
        %v878 = vld [vmem:[#allocation2 + $0x50] sm:$0xff]
        %v879 = vld [vmem:[#allocation2 + $0x58] sm:$0xff]
        %v880 = vld [vmem:[#allocation2 + $0x60] sm:$0xff]
        %v881 = vld [vmem:[#allocation2 + $0x68] sm:$0xff]
        %v882 = vld [vmem:[#allocation2 + $0x70] sm:$0xff]
        %v883 = vld [vmem:[#allocation2 + $0x78] sm:$0xff]
        %v884 = vld [vmem:[#allocation4] sm:$0xff]
        %v885 = vld [vmem:[#allocation4 + $0x8] sm:$0xff]
        %v886 = vld [vmem:[#allocation4 + $0x10] sm:$0xff]
        %v887 = vld [vmem:[#allocation4 + $0x18] sm:$0xff]
        %v888 = vld [vmem:[#allocation4 + $0x20] sm:$0xff]
        %v889 = vld [vmem:[#allocation4 + $0x28] sm:$0xff]
        %v890 = vld [vmem:[#allocation4 + $0x30] sm:$0xff]
        %v891 = vld [vmem:[#allocation4 + $0x38] sm:$0xff]
        %v892 = vld [vmem:[#allocation4 + $0x40] sm:$0xff]
        %v893 = vld [vmem:[#allocation4 + $0x48] sm:$0xff]
        %v894 = vld [vmem:[#allocation4 + $0x50] sm:$0xff]
        %v895 = vld [vmem:[#allocation4 + $0x58] sm:$0xff]
        %v896 = vld [vmem:[#allocation4 + $0x60] sm:$0xff]
        %v897 = vld [vmem:[#allocation4 + $0x68] sm:$0xff]
        %v898 = vld [vmem:[#allocation4 + $0x70] sm:$0xff]
        %v899 = vld [vmem:[#allocation4 + $0x78] sm:$0xff]
        %900 = vmatpush.msra.mxu0 %v899
        %901 = vmatpush.msra.mxu0 %v898
        %902 = vmatpush.msra.mxu0 %v897
        %903 = vmatpush.msra.mxu0 %v896
        %904 = vmatpush.msra.mxu0 %v895
        %905 = vmatpush.msra.mxu0 %v894
        %906 = vmatpush.msra.mxu0 %v893
        %907 = vmatpush.msra.mxu0 %v892
        %908 = vmatpush.msra.mxu0 %v891
        %909 = vmatpush.msra.mxu0 %v890
        %910 = vmatpush.msra.mxu0 %v889
        %911 = vmatpush.msra.mxu0 %v888
        %912 = vmatpush.msra.mxu0 %v887
        %913 = vmatpush.msra.mxu0 %v886
        %914 = vmatpush.msra.mxu0 %v885
        %915 = vmatpush.msra.mxu0 %v884
        %916 = vmatmul.f32.gmra.mxu0 %v856
        %v917 = vpop.f32.mrf.mxu0
        %v918 = vadd.f32 0.0, %v917
        %919 = vdwg.mxu0
        %920 = vmatpush.msra.mxu0 %v883
        %921 = vmatpush.msra.mxu0 %v882
        %922 = vmatpush.msra.mxu0 %v881
        %923 = vmatpush.msra.mxu0 %v880
        %924 = vmatpush.msra.mxu0 %v879
        %925 = vmatpush.msra.mxu0 %v878
        %926 = vmatpush.msra.mxu0 %v877
        %927 = vmatpush.msra.mxu0 %v876
        %928 = vmatpush.msra.mxu0 %v875
        %929 = vmatpush.msra.mxu0 %v874
        %930 = vmatpush.msra.mxu0 %v873
        %931 = vmatpush.msra.mxu0 %v872
        %932 = vmatpush.msra.mxu0 %v871
        %933 = vmatpush.msra.mxu0 %v870
        %934 = vmatpush.msra.mxu0 %v869
        %935 = vmatpush.msra.mxu0 %v868
        %936 = vmatmul.f32.gmra.mxu0 %v867
        %v937 = vpop.f32.mrf.mxu0
        %v938 = vadd.f32 %v918, %v937
        %939 = vdwg.mxu0
        %v940 = vsub.f32 0.0, %v860
        %v941 = vadd.f32 %v940, %v861
        %v942 = vmul.f32 %v941, 0.1
        %v943 = vadd.f32 %v860, %v942
        %v944 = vmul.f32 %v861, 0.2
        %v945 = vsub.f32 %v861, %v944
        %v946 = vmul.f32 %v863, 1.4285714e-06
        %v947 = vsub.f32 %v863, %v946
        %v948 = vsub.f32 %v943, 1.0
        %v949 = vadd.f32 %v948, %v947
        %vm950 = vcmp.gt.f32.partialorder %v949, 0.0
        %v951 = vsel %vm950, 1, 0
        %v952 = vcvt.s32.f32 %v951
        %v953 = vsub.f32 1.0, %v952
        %v954 = vmul.f32 %v953, %v943
        %v955 = vmul.f32 %v952, 0.0
        %v956 = vadd.f32 %v954, %v955
        %v957 = vadd.f32 %v945, %v938
        %v958 = vmul.f32 %v952, 1.8
        %v959 = vadd.f32 %v947, %v958
        %s960 = scalar_lea.vmem %s546, 24
        %961 = vst [vmem:[%s960] sm:$0xff] %v952
        %962 = vst [vmem:[%s551] sm:$0xff] %v952
        %963 = vst [vmem:[%s555] sm:$0xff] %v956
        %964 = vst [vmem:[%s559] sm:$0xff] %v957
        %965 = vst [vmem:[%s563] sm:$0xff] %v959
        %s966 = smul.u32 4, %s30
        %p967 = scmp.lt.s32.totalorder %s966, 7
        %s968 = scalar_select %p967, %s966, 7
        %p969 = scmp.lt.s32.totalorder %s29, 0
        %s970 = scalar_select %p969, %s29, 0
        %s971 = sadd.s32 %s970, %s968
        %s972 = smul.addr %s971, 8
        %s973 = scalar_lea.vmem %s7, %s972
        %p974 = scmp.lt.s32.totalorder %s29, 0
        %s975 = scalar_select %p974, %s29, 0
        %s976 = smul.addr %s975, 8
        %s977 = scalar_lea.vmem %s8, %s976
        %p978 = scmp.lt.s32.totalorder %s29, 0
        %s979 = scalar_select %p978, %s29, 0
        %s980 = smul.addr %s979, 8
        %s981 = scalar_lea.vmem %s9, %s980
        %p982 = scmp.lt.s32.totalorder %s29, 0
        %s983 = scalar_select %p982, %s29, 0
        %s984 = smul.addr %s983, 8
        %s985 = scalar_lea.vmem %s10, %s984
        %p986 = scmp.lt.s32.totalorder %s29, 0
        %s987 = scalar_select %p986, %s29, 0
        %s988 = smul.addr %s987, 8
        %s989 = scalar_lea.vmem %s11, %s988
        // Predicated region
        $region61: #{lsnn_sequence.1} parent=47 // pred_check
          %p990 = pneg %p231
        $region62: #{lsnn_sequence.1} parent=47 // pred_check_branch
          %992 = sbr.rel (%p990) target = $region64
        $region63: #{lsnn_sequence.1} parent=47 // pred_region
          %s993 = smul.u32 4, %s30
        $region64: #{lsnn_sequence.1} parent=47 // pred_fallthru
          _
        // Predicated region
        $region65: #{lsnn_sequence.1} parent=47 // pred_check
          %p994 = pneg %p257
        $region66: #{lsnn_sequence.1} parent=47 // pred_check_branch
          %996 = sbr.rel (%p994) target = $region68
        $region67: #{lsnn_sequence.1} parent=47 // pred_region
          _
        $region68: #{lsnn_sequence.1} parent=47 // pred_fallthru
          _
        // Predicated region
        $region69: #{lsnn_sequence.1} parent=47 // pred_check
          %p997 = pneg %p283
        $region70: #{lsnn_sequence.1} parent=47 // pred_check_branch
          %999 = sbr.rel (%p997) target = $region72
        $region71: #{lsnn_sequence.1} parent=47 // pred_region
          _
        $region72: #{lsnn_sequence.1} parent=47 // pred_fallthru
          _
        // Predicated region
        $region73: #{lsnn_sequence.1} parent=47 // pred_check
          %p1000 = pneg %p309
        $region74: #{lsnn_sequence.1} parent=47 // pred_check_branch
          %1002 = sbr.rel (%p1000) target = $region76
        $region75: #{lsnn_sequence.1} parent=47 // pred_region
          _
        $region76: #{lsnn_sequence.1} parent=47 // pred_fallthru
          _
        // Predicated region
        $region77: #{lsnn_sequence.1} parent=47 // pred_check
          %p1003 = pneg %p335
        $region78: #{lsnn_sequence.1} parent=47 // pred_check_branch
          %1005 = sbr.rel (%p1003) target = $region80
        $region79: #{lsnn_sequence.1} parent=47 // pred_region
          _
        $region80: #{lsnn_sequence.1} parent=47 // pred_fallthru
          _
        // Predicated region
        $region81: #{lsnn_sequence.1} parent=47 // pred_check
          %p1006 = pneg %p257
        $region82: #{lsnn_sequence.1} parent=47 // pred_check_branch
          %1008 = sbr.rel (%p1006) target = $region84
        $region83: #{lsnn_sequence.1} parent=47 // pred_region
          %p1009 = scmp.lt.s32.totalorder %s29, 0
          %s1010 = scalar_select %p1009, %s29, 0
          %s1011 = smul.addr %s1010, 8
          %s1012 = scalar_lea.vmem %s8, %s1011
        $region84: #{lsnn_sequence.1} parent=47 // pred_fallthru
          _
        // Predicated region
        $region85: #{lsnn_sequence.1} parent=47 // pred_check
          %p1013 = pneg %p283
        $region86: #{lsnn_sequence.1} parent=47 // pred_check_branch
          %1015 = sbr.rel (%p1013) target = $region88
        $region87: #{lsnn_sequence.1} parent=47 // pred_region
          %p1016 = scmp.lt.s32.totalorder %s29, 0
          %s1017 = scalar_select %p1016, %s29, 0
          %s1018 = smul.addr %s1017, 8
          %s1019 = scalar_lea.vmem %s9, %s1018
        $region88: #{lsnn_sequence.1} parent=47 // pred_fallthru
          _
        // Predicated region
        $region89: #{lsnn_sequence.1} parent=47 // pred_check
          %p1020 = pneg %p309
        $region90: #{lsnn_sequence.1} parent=47 // pred_check_branch
          %1022 = sbr.rel (%p1020) target = $region92
        $region91: #{lsnn_sequence.1} parent=47 // pred_region
          %p1023 = scmp.lt.s32.totalorder %s29, 0
          %s1024 = scalar_select %p1023, %s29, 0
          %s1025 = smul.addr %s1024, 8
          %s1026 = scalar_lea.vmem %s10, %s1025
        $region92: #{lsnn_sequence.1} parent=47 // pred_fallthru
          _
        // Predicated region
        $region93: #{lsnn_sequence.1} parent=47 // pred_check
          %p1027 = pneg %p335
        $region94: #{lsnn_sequence.1} parent=47 // pred_check_branch
          %1029 = sbr.rel (%p1027) target = $region96
        $region95: #{lsnn_sequence.1} parent=47 // pred_region
          %p1030 = scmp.lt.s32.totalorder %s29, 0
          %s1031 = scalar_select %p1030, %s29, 0
          %s1032 = smul.addr %s1031, 8
          %s1033 = scalar_lea.vmem %s11, %s1032
        $region96: #{lsnn_sequence.1} parent=47 // pred_fallthru
          _
      $region48: #{lsnn_sequence.1} parent=5 // pred_fallthru
        _
      %p1034 = scmp.le.s32.totalorder 2, %s20
      // Predicated region
      $region97: #{lsnn_sequence.1} parent=5 // pred_check
        %p1035 = pneg %p1034
      $region98: #{lsnn_sequence.1} parent=5 // pred_check_branch
        %1037 = sbr.rel (%p1035) target = $region100
      $region99: #{lsnn_sequence.1} parent=5 // pred_region
        %s1038 = ssub.s32 %s20, 2
        // Predicated region
        $region101: #{lsnn_sequence.1} parent=99 // pred_check
          %p1039 = pneg %p237
        $region102: #{lsnn_sequence.1} parent=99 // pred_check_branch
          %1041 = sbr.rel (%p1039) target = $region104
        $region103: #{lsnn_sequence.1} parent=99 // pred_region
          %s1042 = smul.u32 4, %s32
          %p1043 = scmp.lt.s32.totalorder %s1042, 7
          %s1044 = scalar_select %p1043, %s1042, 7
          %p1045 = scmp.lt.s32.totalorder %s31, 0
          %s1046 = scalar_select %p1045, %s31, 0
          %s1047 = sadd.s32 %s1046, %s1044
          %s1048 = smul.addr %s1047, 8
          %s1049 = scalar_lea.vmem %s7, %s1048
        $region104: #{lsnn_sequence.1} parent=99 // pred_fallthru
          _
      $region100: #{lsnn_sequence.1} parent=5 // pred_fallthru
        _
    $region6: #{lsnn_sequence.1} parent=1 // loop_footer
      %s24 = sadd.s32 1, %s20
    $region7: #{lsnn_sequence.1} parent=1 // loop_footer_branch
      %19 = sbr.rel target = $region3
    $region8: #{lsnn_sequence.1} parent=1 // loop_exit
      _
    %1050 = vsyncpa [#allocation3], 1
    %s1051 = scalar_lea.sflag [#allocation3], 1
    %1052 = vsyncpa %s1051, 1
    %1053 = vsyncpa [#allocation5], 1

</llo_original>
